<compile_context>
chip_gen: v7x
topology: tpu7x:2x2x1
jax: 0.10.0
libtpu: 0.0.40
codegen_flags: <defaults>
</compile_context>

<pallas_src>
import functools

import jax
import jax.numpy as jnp
from jax import lax
from jax.experimental import pallas as pl
from jax.experimental.pallas import tpu as pltpu

_BN_EPS = 1e-5


# ---------------------------------------------------------------------------
# Pallas kernel: fused KxK conv (stride 1) + bias + ReLU on one row tile.
# ---------------------------------------------------------------------------
def _conv_relu_kernel(x_ref, w_ref, b_ref, o_ref, *, K, row_tile, w_out):
    # x_ref: (1, Hp, Wp, Cin)   full padded NHWC image of this batch element
    # w_ref: (K*K, Cin, Cout)   fused weights, one (Cin, Cout) matrix per tap
    # b_ref: (1, Cout)          fused bias
    # o_ref: (1, row_tile*w_out, Cout)  output rows [h0, h0+row_tile)
    h0 = pl.program_id(1) * row_tile
    c_in = x_ref.shape[3]
    c_out = w_ref.shape[2]

    acc = jnp.zeros((row_tile * w_out, c_out), jnp.float32)
    for dy in range(K):
        for dx in range(K):
            # Shifted window for this conv tap: (row_tile, w_out, Cin).
            xs = x_ref[0, pl.ds(h0 + dy, row_tile), pl.ds(dx, w_out), :]
            # Collapse the two spatial dims (lane dim Cin untouched) and feed
            # the MXU a proper (pixels, Cin) @ (Cin, Cout) matmul.
            xm = xs.reshape(row_tile * w_out, c_in)
            acc = acc + jnp.dot(xm, w_ref[dy * K + dx],
                                preferred_element_type=jnp.float32)
    acc = acc + b_ref[...]
    o_ref[0] = jnp.maximum(acc, 0.0)


def reparam_conv2d_relu(x_nchw, w_oihw, bias, *, padding, row_tile=None):
    """ReLU(conv2d(x, w, bias)) with stride 1, groups 1, symmetric padding."""
    B, Cin, H, W = x_nchw.shape
    Cout, Cin2, K, K2 = w_oihw.shape
    assert Cin2 == Cin and K2 == K, "only groups=1 square kernels supported"
    p = padding
    Hp, Wp = H + 2 * p, W + 2 * p
    Hout, Wout = Hp - K + 1, Wp - K + 1

    # NHWC + spatial zero padding done once in the wrapper (channels -> lanes).
    xp = jnp.pad(x_nchw.astype(jnp.float32), ((0, 0), (0, 0), (p, p), (p, p)))
    xp = jnp.transpose(xp, (0, 2, 3, 1))                       # (B, Hp, Wp, Cin)
    # One (Cin, Cout) matrix per conv tap.
    wt = jnp.transpose(w_oihw.astype(jnp.float32), (2, 3, 1, 0)).reshape(
        K * K, Cin, Cout)
    bb = bias.astype(jnp.float32).reshape(1, Cout)

    if row_tile is None:
        # Largest divisor of Hout whose per-tap slab stays ~<= 1 MiB.
        budget_rows = max(1, (1 << 20) // (Wout * max(Cin, Cout) * 4))
        row_tile = 1
        for d in range(1, Hout + 1):
            if Hout % d == 0 and d <= budget_rows:
                row_tile = d
    assert Hout % row_tile == 0, "row_tile must divide the output height"

    grid = (B, Hout // row_tile)
    kernel = functools.partial(_conv_relu_kernel, K=K, row_tile=row_tile,
                               w_out=Wout)

    out_flat = pl.pallas_call(
        kernel,
        out_shape=jax.ShapeDtypeStruct((B, Hout * Wout, Cout), jnp.float32),
        grid_spec=pltpu.PrefetchScalarGridSpec(
            num_scalar_prefetch=0,
            grid=grid,
            in_specs=[
                # Whole padded image per batch element; block index does not
                # change along the inner h axis -> DMA'd once per image.
                pl.BlockSpec((1, Hp, Wp, Cin), lambda b, h: (b, 0, 0, 0)),
                pl.BlockSpec((K * K, Cin, Cout), lambda b, h: (0, 0, 0)),
                pl.BlockSpec((1, Cout), lambda b, h: (0, 0)),
            ],
            out_specs=pl.BlockSpec((1, row_tile * Wout, Cout),
                                   lambda b, h: (b, h, 0)),
        ),
        compiler_params=pltpu.CompilerParams(
            dimension_semantics=("parallel", "parallel")),
    )(xp, wt, bb)

    out = out_flat.reshape(B, Hout, Wout, Cout)
    return jnp.transpose(out, (0, 3, 1, 2))                    # back to NCHW


# ---------------------------------------------------------------------------
# Branch / BatchNorm folding (pure JAX, mirrors RepMobileBlock._get_kernel_bias)
# ---------------------------------------------------------------------------
def _fuse_conv_bn(w, gamma, beta, mean, var, eps=_BN_EPS):
    std = jnp.sqrt(var + eps)
    t = gamma / std
    return w * t[:, None, None, None], beta - mean * t


def get_fused_kernel_bias(conv_branches, scale_branch, skip_bn, *,
                          in_channels, K, groups=1, eps=_BN_EPS):
    c_out = conv_branches[0][0].shape[0]
    input_dim = in_channels // groups
    w_sum = jnp.zeros((c_out, input_dim, K, K), jnp.float32)
    b_sum = jnp.zeros((c_out,), jnp.float32)

    for w, bn in conv_branches:                       # KxK conv + BN branches
        wf, bf = _fuse_conv_bn(w, *bn, eps=eps)
        w_sum, b_sum = w_sum + wf, b_sum + bf

    if scale_branch is not None:                      # 1x1 conv + BN branch
        ws, bn = scale_branch
        wf, bf = _fuse_conv_bn(ws, *bn, eps=eps)
        pad = K // 2
        wf = jnp.pad(wf, ((0, 0), (0, 0), (pad, pad), (pad, pad)))
        w_sum, b_sum = w_sum + wf, b_sum + bf

    if skip_bn is not None:                           # BN identity branch
        gamma, beta, mean, var = skip_bn
        idk = jnp.zeros((in_channels, input_dim, K, K), jnp.float32)
        idk = idk.at[jnp.arange(in_channels),
                     jnp.arange(in_channels) % input_dim,
                     K // 2, K // 2].set(1.0)
        wf, bf = _fuse_conv_bn(idk, gamma, beta, mean, var, eps=eps)
        w_sum, b_sum = w_sum + wf, b_sum + bf

    return w_sum, b_sum


# ---------------------------------------------------------------------------
# Pure-JAX reference: the un-fused multi-branch forward (eval-mode BN).
# ---------------------------------------------------------------------------
def rep_mobile_block_ref(x, conv_branches, scale_branch, skip_bn, *,
                         padding, eps=_BN_EPS):
    def bn_eval(y, gamma, beta, mean, var):
        t = gamma / jnp.sqrt(var + eps)
        return (y - mean[None, :, None, None]) * t[None, :, None, None] \
            + beta[None, :, None, None]

    def conv(y, w, pad):
        return lax.conv_general_dilated(
            y, w, window_strides=(1, 1), padding=[(pad, pad), (pad, pad)],
            dimension_numbers=("NCHW", "OIHW", "NCHW"),
            precision=lax.Precision.HIGHEST)

    out = jnp.zeros_like(x)
    if skip_bn is not None:
        out = out + bn_eval(x, *skip_bn)
    if scale_branch is not None:
        ws, bn = scale_branch
        out = out + bn_eval(conv(x, ws, 0), *bn)
    for w, bn in conv_branches:
        out = out + bn_eval(conv(x, w, padding), *bn)
    return jnp.maximum(out, 0.0)


def _make_bn(key, c):
    k1, k2, k3, k4 = jax.random.split(key, 4)
    gamma = 1.0 + 0.1 * jax.random.normal(k1, (c,), jnp.float32)
    beta = 0.1 * jax.random.normal(k2, (c,), jnp.float32)
    mean = 0.1 * jax.random.normal(k3, (c,), jnp.float32)
    var = jax.random.uniform(k4, (c,), jnp.float32, minval=0.5, maxval=1.5)
    return gamma, beta, mean, var


if __name__ == "__main__":
    # Small config consistent with the module defaults: in==out, stride=1,
    # kernel=3, padding=1, groups=1 -> identity, scale and 3 conv branches all
    # active in the forward pass.
    B, C, H, W = 2, 64, 16, 16
    K, padding, num_branches = 3, 1, 3

    key = jax.random.PRNGKey(0)
    keys = jax.random.split(key, 10)

    x = jax.random.normal(keys[0], (B, C, H, W), dtype=jnp.float32)

    conv_branches = []
    for i in range(num_branches):
        w = 0.1 * jax.random.normal(keys[1 + 2 * i], (C, C, K, K), jnp.float32)
        conv_branches.append((w, _make_bn(keys[2 + 2 * i], C)))
    w_scale = 0.1 * jax.random.normal(keys[7], (C, C, 1, 1), jnp.float32)
    scale_branch = (w_scale, _make_bn(keys[8], C))
    skip_bn = _make_bn(keys[9], C)

    # Fold all branches + BN into a single (Cout, Cin, K, K) kernel and bias
    # (pure JAX, outside the Pallas kernel), then run the fused conv + ReLU.
    w_fused, b_fused = get_fused_kernel_bias(
        conv_branches, scale_branch, skip_bn, in_channels=C, K=K)

    out = reparam_conv2d_relu(x, w_fused, b_fused, padding=padding, row_tile=8)
    out = jax.block_until_ready(out)

    ref = rep_mobile_block_ref(x, conv_branches, scale_branch, skip_bn,
                               padding=padding)
    assert out.shape == ref.shape
    # Tolerance covers possible reduced-precision (bf16 multi-pass) f32 MXU
    # matmuls inside the kernel vs. the HIGHEST-precision XLA reference conv.
    assert bool(jnp.allclose(out, ref, atol=5e-2, rtol=5e-2)), \
        "mismatch vs multi-branch reference"

    print("KERNEL_OK")
</pallas_src>

<mosaic_0001>
module attributes {stable_mosaic.version = 11 : i64} {
  func.func @_conv_relu_kernel(%arg0: i32, %arg1: i32, %arg2: memref<1x18x18x64xf32, #tpu.memory_space<vmem>>, %arg3: memref<9x64x64xf32, #tpu.memory_space<vmem>>, %arg4: memref<1x64xf32, #tpu.memory_space<vmem>>, %arg5: memref<1x128x64xf32, #tpu.memory_space<vmem>>) attributes {dimension_semantics = [#tpu.dimension_semantics<parallel>, #tpu.dimension_semantics<parallel>], iteration_bounds = array<i64: 2, 2>, scalar_prefetch = 0 : i64, scratch_operands = 0 : i64, tpu.core_type = #tpu.core_type<tc>, window_params = [{transform_indices = @transform_0, window_bounds = array<i64: 1, 18, 18, 64>}, {pipeline_mode = #tpu.pipeline_mode<synchronous>, transform_indices = @transform_1, window_bounds = array<i64: 9, 64, 64>}, {pipeline_mode = #tpu.pipeline_mode<synchronous>, transform_indices = @transform_2, window_bounds = array<i64: 1, 64>}, {transform_indices = @transform_3, window_bounds = array<i64: 1, 128, 64>}]} {
    %c8_i32 = arith.constant 8 : i32
    %0 = arith.muli %arg1, %c8_i32 : i32
    %cst = arith.constant 0.000000e+00 : f32
    %1 = vector.broadcast %cst : f32 to vector<128x64xf32>
    %c0_i32 = arith.constant 0 : i32
    %2 = arith.addi %0, %c0_i32 : i32
    %c0 = arith.constant 0 : index
    %3 = arith.index_cast %2 : i32 to index
    %c0_0 = arith.constant 0 : index
    %c0_1 = arith.constant 0 : index
    %4 = vector.load %arg2[%c0, %3, %c0_0, %c0_1] : memref<1x18x18x64xf32, #tpu.memory_space<vmem>>, vector<1x8x16x64xf32>
    %5 = vector.shape_cast %4 : vector<1x8x16x64xf32> to vector<8x16x64xf32>
    %6 = vector.shape_cast %5 : vector<8x16x64xf32> to vector<128x64xf32>
    %c0_2 = arith.constant 0 : index
    %c0_3 = arith.constant 0 : index
    %c0_4 = arith.constant 0 : index
    %7 = vector.load %arg3[%c0_2, %c0_3, %c0_4] : memref<9x64x64xf32, #tpu.memory_space<vmem>>, vector<1x64x64xf32>
    %8 = vector.shape_cast %7 : vector<1x64x64xf32> to vector<64x64xf32>
    %cst_5 = arith.constant dense<0.000000e+00> : vector<128x64xf32>
    %9 = tpu.matmul %6, %8, %cst_5 {dimension_numbers = #tpu.dot_dimension_numbers<[1], [0], [0], [1], [0, 0, 1, 1], [], []>} : vector<128x64xf32>, vector<64x64xf32>, vector<128x64xf32> -> vector<128x64xf32>
    %10 = arith.addf %1, %9 : vector<128x64xf32>
    %c0_i32_6 = arith.constant 0 : i32
    %11 = arith.addi %0, %c0_i32_6 : i32
    %c0_7 = arith.constant 0 : index
    %12 = arith.index_cast %11 : i32 to index
    %c1 = arith.constant 1 : index
    %c0_8 = arith.constant 0 : index
    %13 = vector.load %arg2[%c0_7, %12, %c1, %c0_8] : memref<1x18x18x64xf32, #tpu.memory_space<vmem>>, vector<1x8x16x64xf32>
    %14 = vector.shape_cast %13 : vector<1x8x16x64xf32> to vector<8x16x64xf32>
    %15 = vector.shape_cast %14 : vector<8x16x64xf32> to vector<128x64xf32>
    %c1_9 = arith.constant 1 : index
    %c0_10 = arith.constant 0 : index
    %c0_11 = arith.constant 0 : index
    %16 = vector.load %arg3[%c1_9, %c0_10, %c0_11] : memref<9x64x64xf32, #tpu.memory_space<vmem>>, vector<1x64x64xf32>
    %17 = vector.shape_cast %16 : vector<1x64x64xf32> to vector<64x64xf32>
    %cst_12 = arith.constant dense<0.000000e+00> : vector<128x64xf32>
    %18 = tpu.matmul %15, %17, %cst_12 {dimension_numbers = #tpu.dot_dimension_numbers<[1], [0], [0], [1], [0, 0, 1, 1], [], []>} : vector<128x64xf32>, vector<64x64xf32>, vector<128x64xf32> -> vector<128x64xf32>
    %19 = arith.addf %10, %18 : vector<128x64xf32>
    %c0_i32_13 = arith.constant 0 : i32
    %20 = arith.addi %0, %c0_i32_13 : i32
    %c0_14 = arith.constant 0 : index
    %21 = arith.index_cast %20 : i32 to index
    %c2 = arith.constant 2 : index
    %c0_15 = arith.constant 0 : index
    %22 = vector.load %arg2[%c0_14, %21, %c2, %c0_15] : memref<1x18x18x64xf32, #tpu.memory_space<vmem>>, vector<1x8x16x64xf32>
    %23 = vector.shape_cast %22 : vector<1x8x16x64xf32> to vector<8x16x64xf32>
    %24 = vector.shape_cast %23 : vector<8x16x64xf32> to vector<128x64xf32>
    %c2_16 = arith.constant 2 : index
    %c0_17 = arith.constant 0 : index
    %c0_18 = arith.constant 0 : index
    %25 = vector.load %arg3[%c2_16, %c0_17, %c0_18] : memref<9x64x64xf32, #tpu.memory_space<vmem>>, vector<1x64x64xf32>
    %26 = vector.shape_cast %25 : vector<1x64x64xf32> to vector<64x64xf32>
    %cst_19 = arith.constant dense<0.000000e+00> : vector<128x64xf32>
    %27 = tpu.matmul %24, %26, %cst_19 {dimension_numbers = #tpu.dot_dimension_numbers<[1], [0], [0], [1], [0, 0, 1, 1], [], []>} : vector<128x64xf32>, vector<64x64xf32>, vector<128x64xf32> -> vector<128x64xf32>
    %28 = arith.addf %19, %27 : vector<128x64xf32>
    %c1_i32 = arith.constant 1 : i32
    %29 = arith.addi %0, %c1_i32 : i32
    %c0_20 = arith.constant 0 : index
    %30 = arith.index_cast %29 : i32 to index
    %c0_21 = arith.constant 0 : index
    %c0_22 = arith.constant 0 : index
    %31 = vector.load %arg2[%c0_20, %30, %c0_21, %c0_22] : memref<1x18x18x64xf32, #tpu.memory_space<vmem>>, vector<1x8x16x64xf32>
    %32 = vector.shape_cast %31 : vector<1x8x16x64xf32> to vector<8x16x64xf32>
    %33 = vector.shape_cast %32 : vector<8x16x64xf32> to vector<128x64xf32>
    %c3 = arith.constant 3 : index
    %c0_23 = arith.constant 0 : index
    %c0_24 = arith.constant 0 : index
    %34 = vector.load %arg3[%c3, %c0_23, %c0_24] : memref<9x64x64xf32, #tpu.memory_space<vmem>>, vector<1x64x64xf32>
    %35 = vector.shape_cast %34 : vector<1x64x64xf32> to vector<64x64xf32>
    %cst_25 = arith.constant dense<0.000000e+00> : vector<128x64xf32>
    %36 = tpu.matmul %33, %35, %cst_25 {dimension_numbers = #tpu.dot_dimension_numbers<[1], [0], [0], [1], [0, 0, 1, 1], [], []>} : vector<128x64xf32>, vector<64x64xf32>, vector<128x64xf32> -> vector<128x64xf32>
    %37 = arith.addf %28, %36 : vector<128x64xf32>
    %c1_i32_26 = arith.constant 1 : i32
    %38 = arith.addi %0, %c1_i32_26 : i32
    %c0_27 = arith.constant 0 : index
    %39 = arith.index_cast %38 : i32 to index
    %c1_28 = arith.constant 1 : index
    %c0_29 = arith.constant 0 : index
    %40 = vector.load %arg2[%c0_27, %39, %c1_28, %c0_29] : memref<1x18x18x64xf32, #tpu.memory_space<vmem>>, vector<1x8x16x64xf32>
    %41 = vector.shape_cast %40 : vector<1x8x16x64xf32> to vector<8x16x64xf32>
    %42 = vector.shape_cast %41 : vector<8x16x64xf32> to vector<128x64xf32>
    %c4 = arith.constant 4 : index
    %c0_30 = arith.constant 0 : index
    %c0_31 = arith.constant 0 : index
    %43 = vector.load %arg3[%c4, %c0_30, %c0_31] : memref<9x64x64xf32, #tpu.memory_space<vmem>>, vector<1x64x64xf32>
    %44 = vector.shape_cast %43 : vector<1x64x64xf32> to vector<64x64xf32>
    %cst_32 = arith.constant dense<0.000000e+00> : vector<128x64xf32>
    %45 = tpu.matmul %42, %44, %cst_32 {dimension_numbers = #tpu.dot_dimension_numbers<[1], [0], [0], [1], [0, 0, 1, 1], [], []>} : vector<128x64xf32>, vector<64x64xf32>, vector<128x64xf32> -> vector<128x64xf32>
    %46 = arith.addf %37, %45 : vector<128x64xf32>
    %c1_i32_33 = arith.constant 1 : i32
    %47 = arith.addi %0, %c1_i32_33 : i32
    %c0_34 = arith.constant 0 : index
    %48 = arith.index_cast %47 : i32 to index
    %c2_35 = arith.constant 2 : index
    %c0_36 = arith.constant 0 : index
    %49 = vector.load %arg2[%c0_34, %48, %c2_35, %c0_36] : memref<1x18x18x64xf32, #tpu.memory_space<vmem>>, vector<1x8x16x64xf32>
    %50 = vector.shape_cast %49 : vector<1x8x16x64xf32> to vector<8x16x64xf32>
    %51 = vector.shape_cast %50 : vector<8x16x64xf32> to vector<128x64xf32>
    %c5 = arith.constant 5 : index
    %c0_37 = arith.constant 0 : index
    %c0_38 = arith.constant 0 : index
    %52 = vector.load %arg3[%c5, %c0_37, %c0_38] : memref<9x64x64xf32, #tpu.memory_space<vmem>>, vector<1x64x64xf32>
    %53 = vector.shape_cast %52 : vector<1x64x64xf32> to vector<64x64xf32>
    %cst_39 = arith.constant dense<0.000000e+00> : vector<128x64xf32>
    %54 = tpu.matmul %51, %53, %cst_39 {dimension_numbers = #tpu.dot_dimension_numbers<[1], [0], [0], [1], [0, 0, 1, 1], [], []>} : vector<128x64xf32>, vector<64x64xf32>, vector<128x64xf32> -> vector<128x64xf32>
    %55 = arith.addf %46, %54 : vector<128x64xf32>
    %c2_i32 = arith.constant 2 : i32
    %56 = arith.addi %0, %c2_i32 : i32
    %c0_40 = arith.constant 0 : index
    %57 = arith.index_cast %56 : i32 to index
    %c0_41 = arith.constant 0 : index
    %c0_42 = arith.constant 0 : index
    %58 = vector.load %arg2[%c0_40, %57, %c0_41, %c0_42] : memref<1x18x18x64xf32, #tpu.memory_space<vmem>>, vector<1x8x16x64xf32>
    %59 = vector.shape_cast %58 : vector<1x8x16x64xf32> to vector<8x16x64xf32>
    %60 = vector.shape_cast %59 : vector<8x16x64xf32> to vector<128x64xf32>
    %c6 = arith.constant 6 : index
    %c0_43 = arith.constant 0 : index
    %c0_44 = arith.constant 0 : index
    %61 = vector.load %arg3[%c6, %c0_43, %c0_44] : memref<9x64x64xf32, #tpu.memory_space<vmem>>, vector<1x64x64xf32>
    %62 = vector.shape_cast %61 : vector<1x64x64xf32> to vector<64x64xf32>
    %cst_45 = arith.constant dense<0.000000e+00> : vector<128x64xf32>
    %63 = tpu.matmul %60, %62, %cst_45 {dimension_numbers = #tpu.dot_dimension_numbers<[1], [0], [0], [1], [0, 0, 1, 1], [], []>} : vector<128x64xf32>, vector<64x64xf32>, vector<128x64xf32> -> vector<128x64xf32>
    %64 = arith.addf %55, %63 : vector<128x64xf32>
    %c2_i32_46 = arith.constant 2 : i32
    %65 = arith.addi %0, %c2_i32_46 : i32
    %c0_47 = arith.constant 0 : index
    %66 = arith.index_cast %65 : i32 to index
    %c1_48 = arith.constant 1 : index
    %c0_49 = arith.constant 0 : index
    %67 = vector.load %arg2[%c0_47, %66, %c1_48, %c0_49] : memref<1x18x18x64xf32, #tpu.memory_space<vmem>>, vector<1x8x16x64xf32>
    %68 = vector.shape_cast %67 : vector<1x8x16x64xf32> to vector<8x16x64xf32>
    %69 = vector.shape_cast %68 : vector<8x16x64xf32> to vector<128x64xf32>
    %c7 = arith.constant 7 : index
    %c0_50 = arith.constant 0 : index
    %c0_51 = arith.constant 0 : index
    %70 = vector.load %arg3[%c7, %c0_50, %c0_51] : memref<9x64x64xf32, #tpu.memory_space<vmem>>, vector<1x64x64xf32>
    %71 = vector.shape_cast %70 : vector<1x64x64xf32> to vector<64x64xf32>
    %cst_52 = arith.constant dense<0.000000e+00> : vector<128x64xf32>
    %72 = tpu.matmul %69, %71, %cst_52 {dimension_numbers = #tpu.dot_dimension_numbers<[1], [0], [0], [1], [0, 0, 1, 1], [], []>} : vector<128x64xf32>, vector<64x64xf32>, vector<128x64xf32> -> vector<128x64xf32>
    %73 = arith.addf %64, %72 : vector<128x64xf32>
    %c2_i32_53 = arith.constant 2 : i32
    %74 = arith.addi %0, %c2_i32_53 : i32
    %c0_54 = arith.constant 0 : index
    %75 = arith.index_cast %74 : i32 to index
    %c2_55 = arith.constant 2 : index
    %c0_56 = arith.constant 0 : index
    %76 = vector.load %arg2[%c0_54, %75, %c2_55, %c0_56] : memref<1x18x18x64xf32, #tpu.memory_space<vmem>>, vector<1x8x16x64xf32>
    %77 = vector.shape_cast %76 : vector<1x8x16x64xf32> to vector<8x16x64xf32>
    %78 = vector.shape_cast %77 : vector<8x16x64xf32> to vector<128x64xf32>
    %c8 = arith.constant 8 : index
    %c0_57 = arith.constant 0 : index
    %c0_58 = arith.constant 0 : index
    %79 = vector.load %arg3[%c8, %c0_57, %c0_58] : memref<9x64x64xf32, #tpu.memory_space<vmem>>, vector<1x64x64xf32>
    %80 = vector.shape_cast %79 : vector<1x64x64xf32> to vector<64x64xf32>
    %cst_59 = arith.constant dense<0.000000e+00> : vector<128x64xf32>
    %81 = tpu.matmul %78, %80, %cst_59 {dimension_numbers = #tpu.dot_dimension_numbers<[1], [0], [0], [1], [0, 0, 1, 1], [], []>} : vector<128x64xf32>, vector<64x64xf32>, vector<128x64xf32> -> vector<128x64xf32>
    %82 = arith.addf %73, %81 : vector<128x64xf32>
    %c0_60 = arith.constant 0 : index
    %c0_61 = arith.constant 0 : index
    %83 = vector.load %arg4[%c0_60, %c0_61] : memref<1x64xf32, #tpu.memory_space<vmem>>, vector<1x64xf32>
    %84 = vector.broadcast %83 : vector<1x64xf32> to vector<128x64xf32>
    %85 = arith.addf %82, %84 : vector<128x64xf32>
    %cst_62 = arith.constant 0.000000e+00 : f32
    %86 = vector.broadcast %cst_62 : f32 to vector<128x64xf32>
    %87 = arith.maximumf %85, %86 : vector<128x64xf32>
    %c0_63 = arith.constant 0 : index
    %c0_64 = arith.constant 0 : index
    %c0_65 = arith.constant 0 : index
    %88 = vector.load %arg5[%c0_63, %c0_64, %c0_65] : memref<1x128x64xf32, #tpu.memory_space<vmem>>, vector<1x128x64xf32>
    %89 = vector.shape_cast %88 : vector<1x128x64xf32> to vector<128x64xf32>
    %90 = vector.shape_cast %87 : vector<128x64xf32> to vector<1x128x64xf32>
    tpu.vector_store %arg5[%c0_63, %c0_64, %c0_65], %90 {strides = array<i32>} : memref<1x128x64xf32, #tpu.memory_space<vmem>>, vector<1x128x64xf32>,
    return
  }
  func.func @transform_0(%arg0: i32, %arg1: i32) -> (i32, i32, i32, i32) {
    %c0_i32 = arith.constant 0 : i32
    %c0_i32_0 = arith.constant 0 : i32
    %c0_i32_1 = arith.constant 0 : i32
    %c0_i32_2 = arith.constant 0 : i32
    return %arg0, %c0_i32, %c0_i32_0, %c0_i32_1 : i32, i32, i32, i32
  }
  func.func @transform_1(%arg0: i32, %arg1: i32) -> (i32, i32, i32) {
    %c0_i32 = arith.constant 0 : i32
    %c0_i32_0 = arith.constant 0 : i32
    %c0_i32_1 = arith.constant 0 : i32
    %c0_i32_2 = arith.constant 0 : i32
    return %c0_i32, %c0_i32_0, %c0_i32_1 : i32, i32, i32
  }
  func.func @transform_2(%arg0: i32, %arg1: i32) -> (i32, i32) {
    %c0_i32 = arith.constant 0 : i32
    %c0_i32_0 = arith.constant 0 : i32
    %c0_i32_1 = arith.constant 0 : i32
    return %c0_i32, %c0_i32_0 : i32, i32
  }
  func.func @transform_3(%arg0: i32, %arg1: i32) -> (i32, i32, i32) {
    %c0_i32 = arith.constant 0 : i32
    %c0_i32_0 = arith.constant 0 : i32
    return %arg0, %arg1, %c0_i32 : i32, i32, i32
  }
}

</mosaic_0001>

<llo_original>
// kernel: tpu_custom_call.1
$region0: #{tpu_custom_call.1}
  #allocation0 [shape = 'u32[]', space=smem, size = 0x4, offset = 0x4, fixed_abs, tag = 'smem constant byte address 0x4 - core index']
  #allocation1 [shape = 'u32[144,128]{1,0:T(1,128)}', space=vmem, size = 0x12000, scoped, tag = 'internal scratch']
  %s0 = inlined_call_operand.vmem [shape: f32[2,18,18,64], index: 0, kind: input, shape index: {}]
  %s1 = inlined_call_operand.vmem [shape: f32[9,64,64], index: 1, kind: input, shape index: {}]
  %s2 = inlined_call_operand.vmem [shape: f32[1,64], index: 2, kind: input, shape index: {}]
  %s3 = inlined_call_operand.vmem [shape: f32[2,256,64], index: 3, kind: output, shape index: {}]
  %s4 = sld [smem:[#allocation0]]
  $region45: #{tpu_custom_call.1} parent=0
    _
  %s6 = ssub.s32 1, %s4
  %s7 = scalar_select 0, %s6, %s4
  loop: start=0, step=1, limit=6
  $region2: #{tpu_custom_call.1} parent=0 // loop_pre_header
    _
  $region3: #{tpu_custom_call.1} parent=0 // loop_header
    %s9 = sphi 0, %s13
    %p10 = scmp.ge.s32.totalorder %s9, 6
    %s16 = sphi 0, %s28
    %s17 = sphi 0, %s24
    %s18 = sphi 0, %s16
    %s19 = sphi 0, %s17
    %s20 = sphi 0, %s18
    %s21 = sphi 0, %s19
    %s31 = sphi 0, %s33
    %s34 = sphi 0, %s31
    %s35 = sphi 0, %s34
    %s51 = sphi 0, %s35
    %s55 = sphi 0, %s55
    %s57 = sphi 0, %s55
    %s58 = sphi 0, %s57
    %s72 = sphi 0, %s58
    %s76 = sphi 0, %s76
    %s78 = sphi 0, %s76
    %s79 = sphi 0, %s78
    %s93 = sphi 0, %s79
    %s101 = sphi 0, %s103
    %s104 = sphi 0, %s101
    %s105 = sphi 0, %s104
    %s121 = sphi 0, %s105
  $region4: #{tpu_custom_call.1} parent=0 // loop_header_branch
    %12 = sbr.rel (%p10) target = $region8
  $region5: #{tpu_custom_call.1} parent=0 // loop_body
    %s14 = ssub.s32 %s9, 1
    %s15 = ssub.s32 %s9, 2
    %s22 = sadd.s32 1, %s17
    %p23 = scmp.ge.s32.totalorder %s22, 2
    %s24 = scalar_select %p23, 0, %s22
    %s25 = sadd.s32 1, %s16
    %s26 = scalar_select %p23, %s25, %s16
    %p27 = scmp.ge.s32.totalorder %s26, 2
    %s28 = scalar_select %p27, 0, %s26
    %s29 = ssub.s32 %s16, %s28
    %p30 = scmp.eq.s32.totalorder %s29, 0
    %s32 = sadd.s32 %s31, 1
    %s33 = scalar_select %p30, %s31, %s32
    %p36 = pneg %p30
    %p37 = scmp.eq.s32.totalorder %s9, 3
    %p38 = por %p36, %p37
    %p39 = scmp.ne.s32.totalorder %s31, %s34
    %p40 = scmp.eq.s32.totalorder %s9, 0
    %p41 = por %p39, %p40
    %p42 = scmp.ne.s32.totalorder %s31, %s34
    %p43 = scmp.eq.s32.totalorder %s14, 3
    %p44 = por %p42, %p43
    %p45 = scmp.ne.s32.totalorder %s34, %s35
    %p46 = scmp.eq.s32.totalorder %s14, 0
    %p47 = por %p45, %p46
    %p48 = scmp.ne.s32.totalorder %s34, %s35
    %p49 = scmp.eq.s32.totalorder %s15, 3
    %p50 = por %p48, %p49
    %p52 = scmp.ne.s32.totalorder %s35, %s51
    %p53 = scmp.eq.s32.totalorder %s15, 0
    %p54 = por %p52, %p53
    %s56 = sadd.s32 %s55, 1
    %p59 = scmp.eq.s32.totalorder %s9, 3
    %p60 = scmp.ne.s32.totalorder %s55, %s57
    %p61 = scmp.eq.s32.totalorder %s9, 0
    %p62 = por %p60, %p61
    %p63 = scmp.ne.s32.totalorder %s55, %s57
    %p64 = scmp.eq.s32.totalorder %s14, 3
    %p65 = por %p63, %p64
    %p66 = scmp.ne.s32.totalorder %s57, %s58
    %p67 = scmp.eq.s32.totalorder %s14, 0
    %p68 = por %p66, %p67
    %p69 = scmp.ne.s32.totalorder %s57, %s58
    %p70 = scmp.eq.s32.totalorder %s15, 3
    %p71 = por %p69, %p70
    %p73 = scmp.ne.s32.totalorder %s58, %s72
    %p74 = scmp.eq.s32.totalorder %s15, 0
    %p75 = por %p73, %p74
    %s77 = sadd.s32 %s76, 1
    %p80 = scmp.eq.s32.totalorder %s9, 3
    %p81 = scmp.ne.s32.totalorder %s76, %s78
    %p82 = scmp.eq.s32.totalorder %s9, 0
    %p83 = por %p81, %p82
    %p84 = scmp.ne.s32.totalorder %s76, %s78
    %p85 = scmp.eq.s32.totalorder %s14, 3
    %p86 = por %p84, %p85
    %p87 = scmp.ne.s32.totalorder %s78, %s79
    %p88 = scmp.eq.s32.totalorder %s14, 0
    %p89 = por %p87, %p88
    %p90 = scmp.ne.s32.totalorder %s78, %s79
    %p91 = scmp.eq.s32.totalorder %s15, 3
    %p92 = por %p90, %p91
    %p94 = scmp.ne.s32.totalorder %s79, %s93
    %p95 = scmp.eq.s32.totalorder %s15, 0
    %p96 = por %p94, %p95
    %s97 = ssub.s32 %s16, %s28
    %s98 = ssub.s32 %s17, %s24
    %s99 = sor.u32 %s97, %s98
    %p100 = scmp.eq.s32.totalorder %s99, 0
    %s102 = sadd.s32 %s101, 1
    %s103 = scalar_select %p100, %s101, %s102
    %p106 = pneg %p100
    %p107 = scmp.eq.s32.totalorder %s9, 3
    %p108 = por %p106, %p107
    %p109 = scmp.ne.s32.totalorder %s101, %s104
    %p110 = scmp.eq.s32.totalorder %s9, 0
    %p111 = por %p109, %p110
    %p112 = scmp.ne.s32.totalorder %s101, %s104
    %p113 = scmp.eq.s32.totalorder %s14, 3
    %p114 = por %p112, %p113
    %p115 = scmp.ne.s32.totalorder %s104, %s105
    %p116 = scmp.eq.s32.totalorder %s14, 0
    %p117 = por %p115, %p116
    %p118 = scmp.ne.s32.totalorder %s104, %s105
    %p119 = scmp.eq.s32.totalorder %s15, 3
    %p120 = por %p118, %p119
    %p122 = scmp.ne.s32.totalorder %s105, %s121
    %p123 = scmp.eq.s32.totalorder %s15, 0
    %p124 = por %p122, %p123
    %p125 = scmp.le.s32.totalorder 1, %s9
    %p126 = scmp.lt.s32.totalorder %s9, 5
    %p127 = pnand %p125, %p126
    %p128 = pneg %p127
    // Predicated region
    $region9: #{tpu_custom_call.1} parent=5 // pred_check
      _
    $region10: #{tpu_custom_call.1} parent=5 // pred_check_branch
      %130 = sbr.rel (%p127) target = $region12
    $region11: #{tpu_custom_call.1} parent=5 // pred_region
      %s131 = ssub.s32 %s9, 1
      // Predicated region
      $region13: #{tpu_custom_call.1} parent=11 // pred_check
        %p132 = pneg %p68
      $region14: #{tpu_custom_call.1} parent=11 // pred_check_branch
        %134 = sbr.rel (%p132) target = $region16
      $region15: #{tpu_custom_call.1} parent=11 // pred_region
        _
      $region16: #{tpu_custom_call.1} parent=11 // pred_fallthru
        _
      // Predicated region
      $region17: #{tpu_custom_call.1} parent=11 // pred_check
        %p135 = pneg %p89
      $region18: #{tpu_custom_call.1} parent=11 // pred_check_branch
        %137 = sbr.rel (%p135) target = $region20
      $region19: #{tpu_custom_call.1} parent=11 // pred_region
        _
      $region20: #{tpu_custom_call.1} parent=11 // pred_fallthru
        _
    $region12: #{tpu_custom_call.1} parent=5 // pred_fallthru
      _
    %p138 = scmp.lt.s32.totalorder %s9, 4
    // Predicated region
    $region21: #{tpu_custom_call.1} parent=5 // pred_check
      %p139 = pneg %p138
    $region22: #{tpu_custom_call.1} parent=5 // pred_check_branch
      %141 = sbr.rel (%p139) target = $region24
    $region23: #{tpu_custom_call.1} parent=5 // pred_region
      // Predicated region
      $region25: #{tpu_custom_call.1} parent=23 // pred_check
        %p142 = pneg %p41
      $region26: #{tpu_custom_call.1} parent=23 // pred_check_branch
        %144 = sbr.rel (%p142) target = $region28
      $region27: #{tpu_custom_call.1} parent=23 // pred_region
        %p145 = scmp.lt.s32.totalorder %s16, 1
        %s146 = scalar_select %p145, %s16, 1
        %s147 = smul.addr %s146, 54
        %s148 = smul.addr %s147, 8
        %s149 = scalar_lea.vmem %s0, %s148
      $region28: #{tpu_custom_call.1} parent=23 // pred_fallthru
        _
    $region24: #{tpu_custom_call.1} parent=5 // pred_fallthru
      _
    %p150 = scmp.le.s32.totalorder 1, %s9
    %p151 = scmp.lt.s32.totalorder %s9, 5
    %p152 = pnand %p150, %p151
    %p153 = pneg %p152
    // Predicated region
    $region29: #{tpu_custom_call.1} parent=5 // pred_check
      _
    $region30: #{tpu_custom_call.1} parent=5 // pred_check_branch
      %155 = sbr.rel (%p152) target = $region32
    $region31: #{tpu_custom_call.1} parent=5 // pred_region
      %s156 = ssub.s32 %s9, 1
      %p157 = scmp.lt.s32.totalorder %s18, 1
      %s158 = scalar_select %p157, %s18, 1
      %s159 = smul.addr %s158, 54
      %s160 = smul.addr %s159, 8
      %s161 = scalar_lea.vmem %s0, %s160
      %p162 = pneg %p47
      %p163 = pneg %p44
      %p164 = pneg %p68
      %p165 = pneg %p65
      %p166 = pneg %p89
      %p167 = pneg %p86
      %p168 = pneg %p117
      %p169 = pneg %p114
      %s170 = smul.u32 16, %s19
      %p171 = scmp.lt.s32.totalorder %s18, 1
      %s172 = scalar_select %p171, %s18, 1
      %p173 = scmp.lt.s32.totalorder %s170, 31
      %s174 = scalar_select %p173, %s170, 31
      %s175 = smul.addr %s172, 32
      %s176 = sadd.s32 %s174, %s175
      %s177 = smul.addr %s176, 8
      %s178 = scalar_lea.vmem %s3, %s177
      %p179 = scmp.lt.s32.totalorder %s18, 1
      %s180 = scalar_select %p179, %s18, 1
      %s181 = smul.addr %s180, 54
      %s182 = smul.addr %s181, 8
      %s183 = scalar_lea.vmem %s0, %s182
      %s184 = smul.u32 16, %s19
      %p185 = scmp.lt.s32.totalorder %s18, 1
      %s186 = scalar_select %p185, %s18, 1
      %p187 = scmp.lt.s32.totalorder %s184, 31
      %s188 = scalar_select %p187, %s184, 31
      %s189 = smul.addr %s186, 32
      %s190 = sadd.s32 %s188, %s189
      %s191 = smul.addr %s190, 8
      %s192 = scalar_lea.vmem %s3, %s191
      %s193 = smul.u32 16, %s19
      %s194 = smul.u32 %s19, 8
      %s195 = smul.u32 %s194, 24
      %s196 = scalar_lea.vmem %s183, %s195
      %v197 = vld [vmem:[%s196] sm:$0xff]
      %v198 = vld [vmem:[%s196 + $0x8] sm:$0xff]
      %v199 = vld [vmem:[%s196 + $0x18] sm:$0xff]
      %v200 = vld [vmem:[%s196 + $0x20] sm:$0xff]
      %v201 = vld [vmem:[%s196 + $0x30] sm:$0xff]
      %v202 = vld [vmem:[%s196 + $0x38] sm:$0xff]
      %v203 = vld [vmem:[%s196 + $0x48] sm:$0xff]
      %v204 = vld [vmem:[%s196 + $0x50] sm:$0xff]
      %v205 = vld [vmem:[%s196 + $0x60] sm:$0xff]
      %v206 = vld [vmem:[%s196 + $0x68] sm:$0xff]
      %v207 = vld [vmem:[%s196 + $0x78] sm:$0xff]
      %v208 = vld [vmem:[%s196 + $0x80] sm:$0xff]
      %v209 = vld [vmem:[%s196 + $0x90] sm:$0xff]
      %v210 = vld [vmem:[%s196 + $0x98] sm:$0xff]
      %v211 = vld [vmem:[%s196 + $0xa8] sm:$0xff]
      %v212 = vld [vmem:[%s196 + $0xb0] sm:$0xff]
      %v213 = vld [vmem:[%s1] sm:$0xff]
      %v214 = vld [vmem:[%s1 + $0x8] sm:$0xff]
      %v215 = vld [vmem:[%s1 + $0x10] sm:$0xff]
      %v216 = vld [vmem:[%s1 + $0x18] sm:$0xff]
      %v217 = vld [vmem:[%s1 + $0x20] sm:$0xff]
      %v218 = vld [vmem:[%s1 + $0x28] sm:$0xff]
      %v219 = vld [vmem:[%s1 + $0x30] sm:$0xff]
      %v220 = vld [vmem:[%s1 + $0x38] sm:$0xff]
      %v221 = vld [vmem:[%s196 + $0x1] sm:$0xff]
      %v222 = vld [vmem:[%s196 + $0x9] sm:$0xff]
      %v223 = vld [vmem:[%s196 + $0x19] sm:$0xff]
      %v224 = vld [vmem:[%s196 + $0x21] sm:$0xff]
      %v225 = vld [vmem:[%s196 + $0x31] sm:$0xff]
      %v226 = vld [vmem:[%s196 + $0x39] sm:$0xff]
      %v227 = vld [vmem:[%s196 + $0x49] sm:$0xff]
      %v228 = vld [vmem:[%s196 + $0x51] sm:$0xff]
      %v229 = vld [vmem:[%s196 + $0x61] sm:$0xff]
      %v230 = vld [vmem:[%s196 + $0x69] sm:$0xff]
      %v231 = vld [vmem:[%s196 + $0x79] sm:$0xff]
      %v232 = vld [vmem:[%s196 + $0x81] sm:$0xff]
      %v233 = vld [vmem:[%s196 + $0x91] sm:$0xff]
      %v234 = vld [vmem:[%s196 + $0x99] sm:$0xff]
      %v235 = vld [vmem:[%s196 + $0xa9] sm:$0xff]
      %v236 = vld [vmem:[%s196 + $0xb1] sm:$0xff]
      %s237 = scalar_lea.vmem %s1, 64
      %v238 = vld [vmem:[%s237] sm:$0xff]
      %v239 = vld [vmem:[%s237 + $0x8] sm:$0xff]
      %v240 = vld [vmem:[%s237 + $0x10] sm:$0xff]
      %v241 = vld [vmem:[%s237 + $0x18] sm:$0xff]
      %v242 = vld [vmem:[%s237 + $0x20] sm:$0xff]
      %v243 = vld [vmem:[%s237 + $0x28] sm:$0xff]
      %v244 = vld [vmem:[%s237 + $0x30] sm:$0xff]
      %v245 = vld [vmem:[%s237 + $0x38] sm:$0xff]
      %vm246 = vcmask 523264
      %v248 = vsel %vm246, %v221, 0
      %v251 = vsel %vm246, %v222, 0
      %v254 = vsel %vm246, %v223, 0
      %v257 = vsel %vm246, %v224, 0
      %v260 = vsel %vm246, %v225, 0
      %v263 = vsel %vm246, %v226, 0
      %v266 = vsel %vm246, %v227, 0
      %v269 = vsel %vm246, %v228, 0
      %v272 = vsel %vm246, %v229, 0
      %v275 = vsel %vm246, %v230, 0
      %v278 = vsel %vm246, %v231, 0
      %v281 = vsel %vm246, %v232, 0
      %v284 = vsel %vm246, %v233, 0
      %v287 = vsel %vm246, %v234, 0
      %v290 = vsel %vm246, %v235, 0
      %v293 = vsel %vm246, %v236, 0
      %295 = vmatprep.subr.mxu0 0.0
      %296 = vmatpush1.msra.mxu0 %v238
      %297 = vmatprep.subr.mxu0 0.0
      %298 = vmatpush1.msra.mxu0 %v239
      %299 = vmatprep.subr.mxu0 0.0
      %300 = vmatpush1.msra.mxu0 %v240
      %301 = vmatprep.subr.mxu0 0.0
      %302 = vmatpush1.msra.mxu0 %v241
      %303 = vmatprep.subr.mxu0 0.0
      %304 = vmatpush1.msra.mxu0 %v242
      %305 = vmatprep.subr.mxu0 0.0
      %306 = vmatpush1.msra.mxu0 %v243
      %307 = vmatprep.subr.mxu0 0.0
      %308 = vmatpush1.msra.mxu0 %v244
      %309 = vmatprep.subr.mxu0 0.0
      %310 = vmatpush1.msra.mxu0 %v245
      %311 = vmatprep.subr.mxu0 0.0
      %312 = vmatpush1.msra.mxu0 0.0
      %313 = vmatprep.subr.mxu0 0.0
      %314 = vmatpush1.msra.mxu0 0.0
      %315 = vmatprep.subr.mxu0 0.0
      %316 = vmatpush1.msra.mxu0 0.0
      %317 = vmatprep.subr.mxu0 0.0
      %318 = vmatpush1.msra.mxu0 0.0
      %319 = vmatprep.subr.mxu0 0.0
      %320 = vmatpush1.msra.mxu0 0.0
      %321 = vmatprep.subr.mxu0 0.0
      %322 = vmatpush1.msra.mxu0 0.0
      %323 = vmatprep.subr.mxu0 0.0
      %324 = vmatpush1.msra.mxu0 0.0
      %325 = vmatprep.subr.mxu0 0.0
      %326 = vmatpush1.msra.mxu0 0.0
      %327 = vmatprep.subr.mxu0 0.0
      %328 = vmatpush1.msra.mxu0 0.0
      %329 = vmatprep.subr.mxu0 0.0
      %330 = vmatpush1.msra.mxu0 0.0
      %331 = vmatprep.subr.mxu0 0.0
      %332 = vmatpush1.msra.mxu0 0.0
      %333 = vmatprep.subr.mxu0 0.0
      %334 = vmatpush1.msra.mxu0 0.0
      %335 = vmatprep.subr.mxu0 0.0
      %336 = vmatpush1.msra.mxu0 0.0
      %337 = vmatprep.subr.mxu0 0.0
      %338 = vmatpush1.msra.mxu0 0.0
      %339 = vmatprep.subr.mxu0 0.0
      %340 = vmatpush1.msra.mxu0 0.0
      %341 = vmatprep.subr.mxu0 0.0
      %342 = vmatpush1.msra.mxu0 0.0
      %343 = vmatprep.subr.mxu0 0.0
      %344 = vmatpush1.msra.mxu0 0.0
      %345 = vmatprep.subr.mxu0 0.0
      %346 = vmatpush1.msra.mxu0 0.0
      %347 = vmatprep.subr.mxu0 0.0
      %348 = vmatpush1.msra.mxu0 0.0
      %349 = vmatprep.subr.mxu0 0.0
      %350 = vmatpush1.msra.mxu0 0.0
      %351 = vmatprep.subr.mxu0 0.0
      %352 = vmatpush1.msra.mxu0 0.0
      %353 = vmatprep.subr.mxu0 0.0
      %354 = vmatpush1.msra.mxu0 0.0
      %355 = vmatprep.subr.mxu0 0.0
      %356 = vmatpush1.msra.mxu0 0.0
      %357 = vmatprep.subr.mxu0 0.0
      %358 = vmatpush1.msra.mxu0 0.0
      %359 = vmatprep.mubr.f32.mxu0 0.0
      %360 = vmatmul.mubr.f32.gmra.mrb[0].mxu0 %v248
      %v361 = vpop.f32.mrb[0].mxu0
      %v362 = vadd.f32 0.0, %v361
      %v363 = vpop.f32.mrb[0].mxu0
      %364 = vmatprep.mubr.f32.mxu0 0.0
      %365 = vmatmul.mubr.f32.gmra.mrb[0].mxu0 %v251
      %v366 = vpop.f32.mrb[0].mxu0
      %v367 = vadd.f32 0.0, %v366
      %v368 = vpop.f32.mrb[0].mxu0
      %369 = vmatprep.mubr.f32.mxu0 0.0
      %370 = vmatmul.mubr.f32.gmra.mrb[0].mxu0 %v254
      %v371 = vpop.f32.mrb[0].mxu0
      %v372 = vadd.f32 0.0, %v371
      %v373 = vpop.f32.mrb[0].mxu0
      %374 = vmatprep.mubr.f32.mxu0 0.0
      %375 = vmatmul.mubr.f32.gmra.mrb[0].mxu0 %v257
      %v376 = vpop.f32.mrb[0].mxu0
      %v377 = vadd.f32 0.0, %v376
      %v378 = vpop.f32.mrb[0].mxu0
      %379 = vmatprep.mubr.f32.mxu0 0.0
      %380 = vmatmul.mubr.f32.gmra.mrb[0].mxu0 %v260
      %v381 = vpop.f32.mrb[0].mxu0
      %v382 = vadd.f32 0.0, %v381
      %v383 = vpop.f32.mrb[0].mxu0
      %384 = vmatprep.mubr.f32.mxu0 0.0
      %385 = vmatmul.mubr.f32.gmra.mrb[0].mxu0 %v263
      %v386 = vpop.f32.mrb[0].mxu0
      %v387 = vadd.f32 0.0, %v386
      %v388 = vpop.f32.mrb[0].mxu0
      %389 = vmatprep.mubr.f32.mxu0 0.0
      %390 = vmatmul.mubr.f32.gmra.mrb[0].mxu0 %v266
      %v391 = vpop.f32.mrb[0].mxu0
      %v392 = vadd.f32 0.0, %v391
      %v393 = vpop.f32.mrb[0].mxu0
      %394 = vmatprep.mubr.f32.mxu0 0.0
      %395 = vmatmul.mubr.f32.gmra.mrb[0].mxu0 %v269
      %v396 = vpop.f32.mrb[0].mxu0
      %v397 = vadd.f32 0.0, %v396
      %v398 = vpop.f32.mrb[0].mxu0
      %399 = vmatprep.mubr.f32.mxu0 0.0
      %400 = vmatmul.mubr.f32.gmra.mrb[0].mxu0 %v272
      %v401 = vpop.f32.mrb[0].mxu0
      %v402 = vadd.f32 0.0, %v401
      %v403 = vpop.f32.mrb[0].mxu0
      %404 = vmatprep.mubr.f32.mxu0 0.0
      %405 = vmatmul.mubr.f32.gmra.mrb[0].mxu0 %v275
      %v406 = vpop.f32.mrb[0].mxu0
      %v407 = vadd.f32 0.0, %v406
      %v408 = vpop.f32.mrb[0].mxu0
      %409 = vmatprep.mubr.f32.mxu0 0.0
      %410 = vmatmul.mubr.f32.gmra.mrb[0].mxu0 %v278
      %v411 = vpop.f32.mrb[0].mxu0
      %v412 = vadd.f32 0.0, %v411
      %v413 = vpop.f32.mrb[0].mxu0
      %414 = vmatprep.mubr.f32.mxu0 0.0
      %415 = vmatmul.mubr.f32.gmra.mrb[0].mxu0 %v281
      %v416 = vpop.f32.mrb[0].mxu0
      %v417 = vadd.f32 0.0, %v416
      %v418 = vpop.f32.mrb[0].mxu0
      %419 = vmatprep.mubr.f32.mxu0 0.0
      %420 = vmatmul.mubr.f32.gmra.mrb[0].mxu0 %v284
      %v421 = vpop.f32.mrb[0].mxu0
      %v422 = vadd.f32 0.0, %v421
      %v423 = vpop.f32.mrb[0].mxu0
      %424 = vmatprep.mubr.f32.mxu0 0.0
      %425 = vmatmul.mubr.f32.gmra.mrb[0].mxu0 %v287
      %v426 = vpop.f32.mrb[0].mxu0
      %v427 = vadd.f32 0.0, %v426
      %v428 = vpop.f32.mrb[0].mxu0
      %429 = vmatprep.mubr.f32.mxu0 0.0
      %430 = vmatmul.mubr.f32.gmra.mrb[0].mxu0 %v290
      %v431 = vpop.f32.mrb[0].mxu0
      %v432 = vadd.f32 0.0, %v431
      %v433 = vpop.f32.mrb[0].mxu0
      %434 = vmatprep.mubr.f32.mxu0 0.0
      %435 = vmatmul.mubr.f32.gmra.mrb[0].mxu0 %v293
      %v436 = vpop.f32.mrb[0].mxu0
      %v437 = vadd.f32 0.0, %v436
      %v438 = vpop.f32.mrb[0].mxu0
      %439 = vdwg.mxu0
      %v441 = vsel %vm246, %v197, 0
      %v444 = vsel %vm246, %v198, 0
      %v447 = vsel %vm246, %v199, 0
      %v450 = vsel %vm246, %v200, 0
      %v453 = vsel %vm246, %v201, 0
      %v456 = vsel %vm246, %v202, 0
      %v459 = vsel %vm246, %v203, 0
      %v462 = vsel %vm246, %v204, 0
      %v465 = vsel %vm246, %v205, 0
      %v468 = vsel %vm246, %v206, 0
      %v471 = vsel %vm246, %v207, 0
      %v474 = vsel %vm246, %v208, 0
      %v477 = vsel %vm246, %v209, 0
      %v480 = vsel %vm246, %v210, 0
      %v483 = vsel %vm246, %v211, 0
      %v486 = vsel %vm246, %v212, 0
      %488 = vmatprep.subr.mxu0 0.0
      %489 = vmatpush1.msra.mxu0 %v213
      %490 = vmatprep.subr.mxu0 0.0
      %491 = vmatpush1.msra.mxu0 %v214
      %492 = vmatprep.subr.mxu0 0.0
      %493 = vmatpush1.msra.mxu0 %v215
      %494 = vmatprep.subr.mxu0 0.0
      %495 = vmatpush1.msra.mxu0 %v216
      %496 = vmatprep.subr.mxu0 0.0
      %497 = vmatpush1.msra.mxu0 %v217
      %498 = vmatprep.subr.mxu0 0.0
      %499 = vmatpush1.msra.mxu0 %v218
      %500 = vmatprep.subr.mxu0 0.0
      %501 = vmatpush1.msra.mxu0 %v219
      %502 = vmatprep.subr.mxu0 0.0
      %503 = vmatpush1.msra.mxu0 %v220
      %504 = vmatprep.subr.mxu0 0.0
      %505 = vmatpush1.msra.mxu0 0.0
      %506 = vmatprep.subr.mxu0 0.0
      %507 = vmatpush1.msra.mxu0 0.0
      %508 = vmatprep.subr.mxu0 0.0
      %509 = vmatpush1.msra.mxu0 0.0
      %510 = vmatprep.subr.mxu0 0.0
      %511 = vmatpush1.msra.mxu0 0.0
      %512 = vmatprep.subr.mxu0 0.0
      %513 = vmatpush1.msra.mxu0 0.0
      %514 = vmatprep.subr.mxu0 0.0
      %515 = vmatpush1.msra.mxu0 0.0
      %516 = vmatprep.subr.mxu0 0.0
      %517 = vmatpush1.msra.mxu0 0.0
      %518 = vmatprep.subr.mxu0 0.0
      %519 = vmatpush1.msra.mxu0 0.0
      %520 = vmatprep.subr.mxu0 0.0
      %521 = vmatpush1.msra.mxu0 0.0
      %522 = vmatprep.subr.mxu0 0.0
      %523 = vmatpush1.msra.mxu0 0.0
      %524 = vmatprep.subr.mxu0 0.0
      %525 = vmatpush1.msra.mxu0 0.0
      %526 = vmatprep.subr.mxu0 0.0
      %527 = vmatpush1.msra.mxu0 0.0
      %528 = vmatprep.subr.mxu0 0.0
      %529 = vmatpush1.msra.mxu0 0.0
      %530 = vmatprep.subr.mxu0 0.0
      %531 = vmatpush1.msra.mxu0 0.0
      %532 = vmatprep.subr.mxu0 0.0
      %533 = vmatpush1.msra.mxu0 0.0
      %534 = vmatprep.subr.mxu0 0.0
      %535 = vmatpush1.msra.mxu0 0.0
      %536 = vmatprep.subr.mxu0 0.0
      %537 = vmatpush1.msra.mxu0 0.0
      %538 = vmatprep.subr.mxu0 0.0
      %539 = vmatpush1.msra.mxu0 0.0
      %540 = vmatprep.subr.mxu0 0.0
      %541 = vmatpush1.msra.mxu0 0.0
      %542 = vmatprep.subr.mxu0 0.0
      %543 = vmatpush1.msra.mxu0 0.0
      %544 = vmatprep.subr.mxu0 0.0
      %545 = vmatpush1.msra.mxu0 0.0
      %546 = vmatprep.subr.mxu0 0.0
      %547 = vmatpush1.msra.mxu0 0.0
      %548 = vmatprep.subr.mxu0 0.0
      %549 = vmatpush1.msra.mxu0 0.0
      %550 = vmatprep.subr.mxu0 0.0
      %551 = vmatpush1.msra.mxu0 0.0
      %552 = vmatprep.mubr.f32.mxu0 0.0
      %553 = vmatmul.mubr.f32.gmra.mrb[0].mxu0 %v441
      %v554 = vpop.f32.mrb[0].mxu0
      %v555 = vadd.f32 %v362, %v554
      %v556 = vpop.f32.mrb[0].mxu0
      %557 = vmatprep.mubr.f32.mxu0 0.0
      %558 = vmatmul.mubr.f32.gmra.mrb[0].mxu0 %v444
      %v559 = vpop.f32.mrb[0].mxu0
      %v560 = vadd.f32 %v367, %v559
      %v561 = vpop.f32.mrb[0].mxu0
      %562 = vmatprep.mubr.f32.mxu0 0.0
      %563 = vmatmul.mubr.f32.gmra.mrb[0].mxu0 %v447
      %v564 = vpop.f32.mrb[0].mxu0
      %v565 = vadd.f32 %v372, %v564
      %v566 = vpop.f32.mrb[0].mxu0
      %567 = vmatprep.mubr.f32.mxu0 0.0
      %568 = vmatmul.mubr.f32.gmra.mrb[0].mxu0 %v450
      %v569 = vpop.f32.mrb[0].mxu0
      %v570 = vadd.f32 %v377, %v569
      %v571 = vpop.f32.mrb[0].mxu0
      %572 = vmatprep.mubr.f32.mxu0 0.0
      %573 = vmatmul.mubr.f32.gmra.mrb[0].mxu0 %v453
      %v574 = vpop.f32.mrb[0].mxu0
      %v575 = vadd.f32 %v382, %v574
      %v576 = vpop.f32.mrb[0].mxu0
      %577 = vmatprep.mubr.f32.mxu0 0.0
      %578 = vmatmul.mubr.f32.gmra.mrb[0].mxu0 %v456
      %v579 = vpop.f32.mrb[0].mxu0
      %v580 = vadd.f32 %v387, %v579
      %v581 = vpop.f32.mrb[0].mxu0
      %582 = vmatprep.mubr.f32.mxu0 0.0
      %583 = vmatmul.mubr.f32.gmra.mrb[0].mxu0 %v459
      %v584 = vpop.f32.mrb[0].mxu0
      %v585 = vadd.f32 %v392, %v584
      %v586 = vpop.f32.mrb[0].mxu0
      %587 = vmatprep.mubr.f32.mxu0 0.0
      %588 = vmatmul.mubr.f32.gmra.mrb[0].mxu0 %v462
      %v589 = vpop.f32.mrb[0].mxu0
      %v590 = vadd.f32 %v397, %v589
      %v591 = vpop.f32.mrb[0].mxu0
      %592 = vmatprep.mubr.f32.mxu0 0.0
      %593 = vmatmul.mubr.f32.gmra.mrb[0].mxu0 %v465
      %v594 = vpop.f32.mrb[0].mxu0
      %v595 = vadd.f32 %v402, %v594
      %v596 = vpop.f32.mrb[0].mxu0
      %597 = vmatprep.mubr.f32.mxu0 0.0
      %598 = vmatmul.mubr.f32.gmra.mrb[0].mxu0 %v468
      %v599 = vpop.f32.mrb[0].mxu0
      %v600 = vadd.f32 %v407, %v599
      %v601 = vpop.f32.mrb[0].mxu0
      %602 = vmatprep.mubr.f32.mxu0 0.0
      %603 = vmatmul.mubr.f32.gmra.mrb[0].mxu0 %v471
      %v604 = vpop.f32.mrb[0].mxu0
      %v605 = vadd.f32 %v412, %v604
      %v606 = vpop.f32.mrb[0].mxu0
      %607 = vmatprep.mubr.f32.mxu0 0.0
      %608 = vmatmul.mubr.f32.gmra.mrb[0].mxu0 %v474
      %v609 = vpop.f32.mrb[0].mxu0
      %v610 = vadd.f32 %v417, %v609
      %v611 = vpop.f32.mrb[0].mxu0
      %612 = vmatprep.mubr.f32.mxu0 0.0
      %613 = vmatmul.mubr.f32.gmra.mrb[0].mxu0 %v477
      %v614 = vpop.f32.mrb[0].mxu0
      %v615 = vadd.f32 %v422, %v614
      %v616 = vpop.f32.mrb[0].mxu0
      %617 = vmatprep.mubr.f32.mxu0 0.0
      %618 = vmatmul.mubr.f32.gmra.mrb[0].mxu0 %v480
      %v619 = vpop.f32.mrb[0].mxu0
      %v620 = vadd.f32 %v427, %v619
      %v621 = vpop.f32.mrb[0].mxu0
      %622 = vmatprep.mubr.f32.mxu0 0.0
      %623 = vmatmul.mubr.f32.gmra.mrb[0].mxu0 %v483
      %v624 = vpop.f32.mrb[0].mxu0
      %v625 = vadd.f32 %v432, %v624
      %v626 = vpop.f32.mrb[0].mxu0
      %627 = vmatprep.mubr.f32.mxu0 0.0
      %628 = vmatmul.mubr.f32.gmra.mrb[0].mxu0 %v486
      %v629 = vpop.f32.mrb[0].mxu0
      %v630 = vadd.f32 %v437, %v629
      %v631 = vpop.f32.mrb[0].mxu0
      %632 = vdwg.mxu0
      %v633 = vld [vmem:[%s196 + $0x2] sm:$0xff]
      %v634 = vld [vmem:[%s196 + $0xa] sm:$0xff]
      %v635 = vld [vmem:[%s196 + $0x1a] sm:$0xff]
      %v636 = vld [vmem:[%s196 + $0x22] sm:$0xff]
      %v637 = vld [vmem:[%s196 + $0x32] sm:$0xff]
      %v638 = vld [vmem:[%s196 + $0x3a] sm:$0xff]
      %v639 = vld [vmem:[%s196 + $0x4a] sm:$0xff]
      %v640 = vld [vmem:[%s196 + $0x52] sm:$0xff]
      %v641 = vld [vmem:[%s196 + $0x62] sm:$0xff]
      %v642 = vld [vmem:[%s196 + $0x6a] sm:$0xff]
      %v643 = vld [vmem:[%s196 + $0x7a] sm:$0xff]
      %v644 = vld [vmem:[%s196 + $0x82] sm:$0xff]
      %v645 = vld [vmem:[%s196 + $0x92] sm:$0xff]
      %v646 = vld [vmem:[%s196 + $0x9a] sm:$0xff]
      %v647 = vld [vmem:[%s196 + $0xaa] sm:$0xff]
      %v648 = vld [vmem:[%s196 + $0xb2] sm:$0xff]
      %s649 = scalar_lea.vmem %s1, 128
      %v650 = vld [vmem:[%s649] sm:$0xff]
      %v651 = vld [vmem:[%s649 + $0x8] sm:$0xff]
      %v652 = vld [vmem:[%s649 + $0x10] sm:$0xff]
      %v653 = vld [vmem:[%s649 + $0x18] sm:$0xff]
      %v654 = vld [vmem:[%s649 + $0x20] sm:$0xff]
      %v655 = vld [vmem:[%s649 + $0x28] sm:$0xff]
      %v656 = vld [vmem:[%s649 + $0x30] sm:$0xff]
      %v657 = vld [vmem:[%s649 + $0x38] sm:$0xff]
      %v659 = vsel %vm246, %v633, 0
      %v662 = vsel %vm246, %v634, 0
      %v665 = vsel %vm246, %v635, 0
      %v668 = vsel %vm246, %v636, 0
      %v671 = vsel %vm246, %v637, 0
      %v674 = vsel %vm246, %v638, 0
      %v677 = vsel %vm246, %v639, 0
      %v680 = vsel %vm246, %v640, 0
      %v683 = vsel %vm246, %v641, 0
      %v686 = vsel %vm246, %v642, 0
      %v689 = vsel %vm246, %v643, 0
      %v692 = vsel %vm246, %v644, 0
      %v695 = vsel %vm246, %v645, 0
      %v698 = vsel %vm246, %v646, 0
      %v701 = vsel %vm246, %v647, 0
      %v704 = vsel %vm246, %v648, 0
      %706 = vmatprep.subr.mxu0 0.0
      %707 = vmatpush1.msra.mxu0 %v650
      %708 = vmatprep.subr.mxu0 0.0
      %709 = vmatpush1.msra.mxu0 %v651
      %710 = vmatprep.subr.mxu0 0.0
      %711 = vmatpush1.msra.mxu0 %v652
      %712 = vmatprep.subr.mxu0 0.0
      %713 = vmatpush1.msra.mxu0 %v653
      %714 = vmatprep.subr.mxu0 0.0
      %715 = vmatpush1.msra.mxu0 %v654
      %716 = vmatprep.subr.mxu0 0.0
      %717 = vmatpush1.msra.mxu0 %v655
      %718 = vmatprep.subr.mxu0 0.0
      %719 = vmatpush1.msra.mxu0 %v656
      %720 = vmatprep.subr.mxu0 0.0
      %721 = vmatpush1.msra.mxu0 %v657
      %722 = vmatprep.subr.mxu0 0.0
      %723 = vmatpush1.msra.mxu0 0.0
      %724 = vmatprep.subr.mxu0 0.0
      %725 = vmatpush1.msra.mxu0 0.0
      %726 = vmatprep.subr.mxu0 0.0
      %727 = vmatpush1.msra.mxu0 0.0
      %728 = vmatprep.subr.mxu0 0.0
      %729 = vmatpush1.msra.mxu0 0.0
      %730 = vmatprep.subr.mxu0 0.0
      %731 = vmatpush1.msra.mxu0 0.0
      %732 = vmatprep.subr.mxu0 0.0
      %733 = vmatpush1.msra.mxu0 0.0
      %734 = vmatprep.subr.mxu0 0.0
      %735 = vmatpush1.msra.mxu0 0.0
      %736 = vmatprep.subr.mxu0 0.0
      %737 = vmatpush1.msra.mxu0 0.0
      %738 = vmatprep.subr.mxu0 0.0
      %739 = vmatpush1.msra.mxu0 0.0
      %740 = vmatprep.subr.mxu0 0.0
      %741 = vmatpush1.msra.mxu0 0.0
      %742 = vmatprep.subr.mxu0 0.0
      %743 = vmatpush1.msra.mxu0 0.0
      %744 = vmatprep.subr.mxu0 0.0
      %745 = vmatpush1.msra.mxu0 0.0
      %746 = vmatprep.subr.mxu0 0.0
      %747 = vmatpush1.msra.mxu0 0.0
      %748 = vmatprep.subr.mxu0 0.0
      %749 = vmatpush1.msra.mxu0 0.0
      %750 = vmatprep.subr.mxu0 0.0
      %751 = vmatpush1.msra.mxu0 0.0
      %752 = vmatprep.subr.mxu0 0.0
      %753 = vmatpush1.msra.mxu0 0.0
      %754 = vmatprep.subr.mxu0 0.0
      %755 = vmatpush1.msra.mxu0 0.0
      %756 = vmatprep.subr.mxu0 0.0
      %757 = vmatpush1.msra.mxu0 0.0
      %758 = vmatprep.subr.mxu0 0.0
      %759 = vmatpush1.msra.mxu0 0.0
      %760 = vmatprep.subr.mxu0 0.0
      %761 = vmatpush1.msra.mxu0 0.0
      %762 = vmatprep.subr.mxu0 0.0
      %763 = vmatpush1.msra.mxu0 0.0
      %764 = vmatprep.subr.mxu0 0.0
      %765 = vmatpush1.msra.mxu0 0.0
      %766 = vmatprep.subr.mxu0 0.0
      %767 = vmatpush1.msra.mxu0 0.0
      %768 = vmatprep.subr.mxu0 0.0
      %769 = vmatpush1.msra.mxu0 0.0
      %770 = vmatprep.mubr.f32.mxu0 0.0
      %771 = vmatmul.mubr.f32.gmra.mrb[0].mxu0 %v659
      %v772 = vpop.f32.mrb[0].mxu0
      %v773 = vadd.f32 0.0, %v772
      %v774 = vpop.f32.mrb[0].mxu0
      %775 = vmatprep.mubr.f32.mxu0 0.0
      %776 = vmatmul.mubr.f32.gmra.mrb[0].mxu0 %v662
      %v777 = vpop.f32.mrb[0].mxu0
      %v778 = vadd.f32 0.0, %v777
      %v779 = vpop.f32.mrb[0].mxu0
      %780 = vmatprep.mubr.f32.mxu0 0.0
      %781 = vmatmul.mubr.f32.gmra.mrb[0].mxu0 %v665
      %v782 = vpop.f32.mrb[0].mxu0
      %v783 = vadd.f32 0.0, %v782
      %v784 = vpop.f32.mrb[0].mxu0
      %785 = vmatprep.mubr.f32.mxu0 0.0
      %786 = vmatmul.mubr.f32.gmra.mrb[0].mxu0 %v668
      %v787 = vpop.f32.mrb[0].mxu0
      %v788 = vadd.f32 0.0, %v787
      %v789 = vpop.f32.mrb[0].mxu0
      %790 = vmatprep.mubr.f32.mxu0 0.0
      %791 = vmatmul.mubr.f32.gmra.mrb[0].mxu0 %v671
      %v792 = vpop.f32.mrb[0].mxu0
      %v793 = vadd.f32 0.0, %v792
      %v794 = vpop.f32.mrb[0].mxu0
      %795 = vmatprep.mubr.f32.mxu0 0.0
      %796 = vmatmul.mubr.f32.gmra.mrb[0].mxu0 %v674
      %v797 = vpop.f32.mrb[0].mxu0
      %v798 = vadd.f32 0.0, %v797
      %v799 = vpop.f32.mrb[0].mxu0
      %800 = vmatprep.mubr.f32.mxu0 0.0
      %801 = vmatmul.mubr.f32.gmra.mrb[0].mxu0 %v677
      %v802 = vpop.f32.mrb[0].mxu0
      %v803 = vadd.f32 0.0, %v802
      %v804 = vpop.f32.mrb[0].mxu0
      %805 = vmatprep.mubr.f32.mxu0 0.0
      %806 = vmatmul.mubr.f32.gmra.mrb[0].mxu0 %v680
      %v807 = vpop.f32.mrb[0].mxu0
      %v808 = vadd.f32 0.0, %v807
      %v809 = vpop.f32.mrb[0].mxu0
      %810 = vmatprep.mubr.f32.mxu0 0.0
      %811 = vmatmul.mubr.f32.gmra.mrb[0].mxu0 %v683
      %v812 = vpop.f32.mrb[0].mxu0
      %v813 = vadd.f32 0.0, %v812
      %v814 = vpop.f32.mrb[0].mxu0
      %815 = vmatprep.mubr.f32.mxu0 0.0
      %816 = vmatmul.mubr.f32.gmra.mrb[0].mxu0 %v686
      %v817 = vpop.f32.mrb[0].mxu0
      %v818 = vadd.f32 0.0, %v817
      %v819 = vpop.f32.mrb[0].mxu0
      %820 = vmatprep.mubr.f32.mxu0 0.0
      %821 = vmatmul.mubr.f32.gmra.mrb[0].mxu0 %v689
      %v822 = vpop.f32.mrb[0].mxu0
      %v823 = vadd.f32 0.0, %v822
      %v824 = vpop.f32.mrb[0].mxu0
      %825 = vmatprep.mubr.f32.mxu0 0.0
      %826 = vmatmul.mubr.f32.gmra.mrb[0].mxu0 %v692
      %v827 = vpop.f32.mrb[0].mxu0
      %v828 = vadd.f32 0.0, %v827
      %v829 = vpop.f32.mrb[0].mxu0
      %830 = vmatprep.mubr.f32.mxu0 0.0
      %831 = vmatmul.mubr.f32.gmra.mrb[0].mxu0 %v695
      %v832 = vpop.f32.mrb[0].mxu0
      %v833 = vadd.f32 0.0, %v832
      %v834 = vpop.f32.mrb[0].mxu0
      %835 = vmatprep.mubr.f32.mxu0 0.0
      %836 = vmatmul.mubr.f32.gmra.mrb[0].mxu0 %v698
      %v837 = vpop.f32.mrb[0].mxu0
      %v838 = vadd.f32 0.0, %v837
      %v839 = vpop.f32.mrb[0].mxu0
      %840 = vmatprep.mubr.f32.mxu0 0.0
      %841 = vmatmul.mubr.f32.gmra.mrb[0].mxu0 %v701
      %v842 = vpop.f32.mrb[0].mxu0
      %v843 = vadd.f32 0.0, %v842
      %v844 = vpop.f32.mrb[0].mxu0
      %845 = vmatprep.mubr.f32.mxu0 0.0
      %846 = vmatmul.mubr.f32.gmra.mrb[0].mxu0 %v704
      %v847 = vpop.f32.mrb[0].mxu0
      %v848 = vadd.f32 0.0, %v847
      %v849 = vpop.f32.mrb[0].mxu0
      %850 = vdwg.mxu0
      %v851 = vadd.f32 %v555, %v773
      %v852 = vadd.f32 %v560, %v778
      %v853 = vadd.f32 %v565, %v783
      %v854 = vadd.f32 %v570, %v788
      %v855 = vadd.f32 %v575, %v793
      %v856 = vadd.f32 %v580, %v798
      %v857 = vadd.f32 %v585, %v803
      %v858 = vadd.f32 %v590, %v808
      %v859 = vadd.f32 %v595, %v813
      %v860 = vadd.f32 %v600, %v818
      %v861 = vadd.f32 %v605, %v823
      %v862 = vadd.f32 %v610, %v828
      %v863 = vadd.f32 %v615, %v833
      %v864 = vadd.f32 %v620, %v838
      %v865 = vadd.f32 %v625, %v843
      %v866 = vadd.f32 %v630, %v848
      %s867 = sadd.s32 %s194, 1
      %s868 = smul.u32 %s867, 24
      %s869 = scalar_lea.vmem %s183, %s868
      %v870 = vld [vmem:[%s869] sm:$0xff]
      %v871 = vld [vmem:[%s869 + $0x8] sm:$0xff]
      %v872 = vld [vmem:[%s869 + $0x18] sm:$0xff]
      %v873 = vld [vmem:[%s869 + $0x20] sm:$0xff]
      %v874 = vld [vmem:[%s869 + $0x30] sm:$0xff]
      %v875 = vld [vmem:[%s869 + $0x38] sm:$0xff]
      %v876 = vld [vmem:[%s869 + $0x48] sm:$0xff]
      %v877 = vld [vmem:[%s869 + $0x50] sm:$0xff]
      %v878 = vld [vmem:[%s869 + $0x60] sm:$0xff]
      %v879 = vld [vmem:[%s869 + $0x68] sm:$0xff]
      %v880 = vld [vmem:[%s869 + $0x78] sm:$0xff]
      %v881 = vld [vmem:[%s869 + $0x80] sm:$0xff]
      %v882 = vld [vmem:[%s869 + $0x90] sm:$0xff]
      %v883 = vld [vmem:[%s869 + $0x98] sm:$0xff]
      %v884 = vld [vmem:[%s869 + $0xa8] sm:$0xff]
      %v885 = vld [vmem:[%s869 + $0xb0] sm:$0xff]
      %s886 = scalar_lea.vmem %s1, 192
      %v887 = vld [vmem:[%s886] sm:$0xff]
      %v888 = vld [vmem:[%s886 + $0x8] sm:$0xff]
      %v889 = vld [vmem:[%s886 + $0x10] sm:$0xff]
      %v890 = vld [vmem:[%s886 + $0x18] sm:$0xff]
      %v891 = vld [vmem:[%s886 + $0x20] sm:$0xff]
      %v892 = vld [vmem:[%s886 + $0x28] sm:$0xff]
      %v893 = vld [vmem:[%s886 + $0x30] sm:$0xff]
      %v894 = vld [vmem:[%s886 + $0x38] sm:$0xff]
      %v896 = vsel %vm246, %v870, 0
      %v899 = vsel %vm246, %v871, 0
      %v902 = vsel %vm246, %v872, 0
      %v905 = vsel %vm246, %v873, 0
      %v908 = vsel %vm246, %v874, 0
      %v911 = vsel %vm246, %v875, 0
      %v914 = vsel %vm246, %v876, 0
      %v917 = vsel %vm246, %v877, 0
      %v920 = vsel %vm246, %v878, 0
      %v923 = vsel %vm246, %v879, 0
      %v926 = vsel %vm246, %v880, 0
      %v929 = vsel %vm246, %v881, 0
      %v932 = vsel %vm246, %v882, 0
      %v935 = vsel %vm246, %v883, 0
      %v938 = vsel %vm246, %v884, 0
      %v941 = vsel %vm246, %v885, 0
      %943 = vmatprep.subr.mxu0 0.0
      %944 = vmatpush1.msra.mxu0 %v887
      %945 = vmatprep.subr.mxu0 0.0
      %946 = vmatpush1.msra.mxu0 %v888
      %947 = vmatprep.subr.mxu0 0.0
      %948 = vmatpush1.msra.mxu0 %v889
      %949 = vmatprep.subr.mxu0 0.0
      %950 = vmatpush1.msra.mxu0 %v890
      %951 = vmatprep.subr.mxu0 0.0
      %952 = vmatpush1.msra.mxu0 %v891
      %953 = vmatprep.subr.mxu0 0.0
      %954 = vmatpush1.msra.mxu0 %v892
      %955 = vmatprep.subr.mxu0 0.0
      %956 = vmatpush1.msra.mxu0 %v893
      %957 = vmatprep.subr.mxu0 0.0
      %958 = vmatpush1.msra.mxu0 %v894
      %959 = vmatprep.subr.mxu0 0.0
      %960 = vmatpush1.msra.mxu0 0.0
      %961 = vmatprep.subr.mxu0 0.0
      %962 = vmatpush1.msra.mxu0 0.0
      %963 = vmatprep.subr.mxu0 0.0
      %964 = vmatpush1.msra.mxu0 0.0
      %965 = vmatprep.subr.mxu0 0.0
      %966 = vmatpush1.msra.mxu0 0.0
      %967 = vmatprep.subr.mxu0 0.0
      %968 = vmatpush1.msra.mxu0 0.0
      %969 = vmatprep.subr.mxu0 0.0
      %970 = vmatpush1.msra.mxu0 0.0
      %971 = vmatprep.subr.mxu0 0.0
      %972 = vmatpush1.msra.mxu0 0.0
      %973 = vmatprep.subr.mxu0 0.0
      %974 = vmatpush1.msra.mxu0 0.0
      %975 = vmatprep.subr.mxu0 0.0
      %976 = vmatpush1.msra.mxu0 0.0
      %977 = vmatprep.subr.mxu0 0.0
      %978 = vmatpush1.msra.mxu0 0.0
      %979 = vmatprep.subr.mxu0 0.0
      %980 = vmatpush1.msra.mxu0 0.0
      %981 = vmatprep.subr.mxu0 0.0
      %982 = vmatpush1.msra.mxu0 0.0
      %983 = vmatprep.subr.mxu0 0.0
      %984 = vmatpush1.msra.mxu0 0.0
      %985 = vmatprep.subr.mxu0 0.0
      %986 = vmatpush1.msra.mxu0 0.0
      %987 = vmatprep.subr.mxu0 0.0
      %988 = vmatpush1.msra.mxu0 0.0
      %989 = vmatprep.subr.mxu0 0.0
      %990 = vmatpush1.msra.mxu0 0.0
      %991 = vmatprep.subr.mxu0 0.0
      %992 = vmatpush1.msra.mxu0 0.0
      %993 = vmatprep.subr.mxu0 0.0
      %994 = vmatpush1.msra.mxu0 0.0
      %995 = vmatprep.subr.mxu0 0.0
      %996 = vmatpush1.msra.mxu0 0.0
      %997 = vmatprep.subr.mxu0 0.0
      %998 = vmatpush1.msra.mxu0 0.0
      %999 = vmatprep.subr.mxu0 0.0
      %1000 = vmatpush1.msra.mxu0 0.0
      %1001 = vmatprep.subr.mxu0 0.0
      %1002 = vmatpush1.msra.mxu0 0.0
      %1003 = vmatprep.subr.mxu0 0.0
      %1004 = vmatpush1.msra.mxu0 0.0
      %1005 = vmatprep.subr.mxu0 0.0
      %1006 = vmatpush1.msra.mxu0 0.0
      %1007 = vmatprep.mubr.f32.mxu0 0.0
      %1008 = vmatmul.mubr.f32.gmra.mrb[0].mxu0 %v896
      %v1009 = vpop.f32.mrb[0].mxu0
      %v1010 = vadd.f32 0.0, %v1009
      %v1011 = vpop.f32.mrb[0].mxu0
      %1012 = vmatprep.mubr.f32.mxu0 0.0
      %1013 = vmatmul.mubr.f32.gmra.mrb[0].mxu0 %v899
      %v1014 = vpop.f32.mrb[0].mxu0
      %v1015 = vadd.f32 0.0, %v1014
      %v1016 = vpop.f32.mrb[0].mxu0
      %1017 = vmatprep.mubr.f32.mxu0 0.0
      %1018 = vmatmul.mubr.f32.gmra.mrb[0].mxu0 %v902
      %v1019 = vpop.f32.mrb[0].mxu0
      %v1020 = vadd.f32 0.0, %v1019
      %v1021 = vpop.f32.mrb[0].mxu0
      %1022 = vmatprep.mubr.f32.mxu0 0.0
      %1023 = vmatmul.mubr.f32.gmra.mrb[0].mxu0 %v905
      %v1024 = vpop.f32.mrb[0].mxu0
      %v1025 = vadd.f32 0.0, %v1024
      %v1026 = vpop.f32.mrb[0].mxu0
      %1027 = vmatprep.mubr.f32.mxu0 0.0
      %1028 = vmatmul.mubr.f32.gmra.mrb[0].mxu0 %v908
      %v1029 = vpop.f32.mrb[0].mxu0
      %v1030 = vadd.f32 0.0, %v1029
      %v1031 = vpop.f32.mrb[0].mxu0
      %1032 = vmatprep.mubr.f32.mxu0 0.0
      %1033 = vmatmul.mubr.f32.gmra.mrb[0].mxu0 %v911
      %v1034 = vpop.f32.mrb[0].mxu0
      %v1035 = vadd.f32 0.0, %v1034
      %v1036 = vpop.f32.mrb[0].mxu0
      %1037 = vmatprep.mubr.f32.mxu0 0.0
      %1038 = vmatmul.mubr.f32.gmra.mrb[0].mxu0 %v914
      %v1039 = vpop.f32.mrb[0].mxu0
      %v1040 = vadd.f32 0.0, %v1039
      %v1041 = vpop.f32.mrb[0].mxu0
      %1042 = vmatprep.mubr.f32.mxu0 0.0
      %1043 = vmatmul.mubr.f32.gmra.mrb[0].mxu0 %v917
      %v1044 = vpop.f32.mrb[0].mxu0
      %v1045 = vadd.f32 0.0, %v1044
      %v1046 = vpop.f32.mrb[0].mxu0
      %1047 = vmatprep.mubr.f32.mxu0 0.0
      %1048 = vmatmul.mubr.f32.gmra.mrb[0].mxu0 %v920
      %v1049 = vpop.f32.mrb[0].mxu0
      %v1050 = vadd.f32 0.0, %v1049
      %v1051 = vpop.f32.mrb[0].mxu0
      %1052 = vmatprep.mubr.f32.mxu0 0.0
      %1053 = vmatmul.mubr.f32.gmra.mrb[0].mxu0 %v923
      %v1054 = vpop.f32.mrb[0].mxu0
      %v1055 = vadd.f32 0.0, %v1054
      %v1056 = vpop.f32.mrb[0].mxu0
      %1057 = vmatprep.mubr.f32.mxu0 0.0
      %1058 = vmatmul.mubr.f32.gmra.mrb[0].mxu0 %v926
      %v1059 = vpop.f32.mrb[0].mxu0
      %v1060 = vadd.f32 0.0, %v1059
      %v1061 = vpop.f32.mrb[0].mxu0
      %1062 = vmatprep.mubr.f32.mxu0 0.0
      %1063 = vmatmul.mubr.f32.gmra.mrb[0].mxu0 %v929
      %v1064 = vpop.f32.mrb[0].mxu0
      %v1065 = vadd.f32 0.0, %v1064
      %v1066 = vpop.f32.mrb[0].mxu0
      %1067 = vmatprep.mubr.f32.mxu0 0.0
      %1068 = vmatmul.mubr.f32.gmra.mrb[0].mxu0 %v932
      %v1069 = vpop.f32.mrb[0].mxu0
      %v1070 = vadd.f32 0.0, %v1069
      %v1071 = vpop.f32.mrb[0].mxu0
      %1072 = vmatprep.mubr.f32.mxu0 0.0
      %1073 = vmatmul.mubr.f32.gmra.mrb[0].mxu0 %v935
      %v1074 = vpop.f32.mrb[0].mxu0
      %v1075 = vadd.f32 0.0, %v1074
      %v1076 = vpop.f32.mrb[0].mxu0
      %1077 = vmatprep.mubr.f32.mxu0 0.0
      %1078 = vmatmul.mubr.f32.gmra.mrb[0].mxu0 %v938
      %v1079 = vpop.f32.mrb[0].mxu0
      %v1080 = vadd.f32 0.0, %v1079
      %v1081 = vpop.f32.mrb[0].mxu0
      %1082 = vmatprep.mubr.f32.mxu0 0.0
      %1083 = vmatmul.mubr.f32.gmra.mrb[0].mxu0 %v941
      %v1084 = vpop.f32.mrb[0].mxu0
      %v1085 = vadd.f32 0.0, %v1084
      %v1086 = vpop.f32.mrb[0].mxu0
      %1087 = vdwg.mxu0
      %v1088 = vadd.f32 %v851, %v1010
      %v1089 = vadd.f32 %v852, %v1015
      %v1090 = vadd.f32 %v853, %v1020
      %v1091 = vadd.f32 %v854, %v1025
      %v1092 = vadd.f32 %v855, %v1030
      %v1093 = vadd.f32 %v856, %v1035
      %v1094 = vadd.f32 %v857, %v1040
      %v1095 = vadd.f32 %v858, %v1045
      %v1096 = vadd.f32 %v859, %v1050
      %v1097 = vadd.f32 %v860, %v1055
      %v1098 = vadd.f32 %v861, %v1060
      %v1099 = vadd.f32 %v862, %v1065
      %v1100 = vadd.f32 %v863, %v1070
      %v1101 = vadd.f32 %v864, %v1075
      %v1102 = vadd.f32 %v865, %v1080
      %v1103 = vadd.f32 %v866, %v1085
      %v1104 = vld [vmem:[%s869 + $0x1] sm:$0xff]
      %v1105 = vld [vmem:[%s869 + $0x9] sm:$0xff]
      %v1106 = vld [vmem:[%s869 + $0x19] sm:$0xff]
      %v1107 = vld [vmem:[%s869 + $0x21] sm:$0xff]
      %v1108 = vld [vmem:[%s869 + $0x31] sm:$0xff]
      %v1109 = vld [vmem:[%s869 + $0x39] sm:$0xff]
      %v1110 = vld [vmem:[%s869 + $0x49] sm:$0xff]
      %v1111 = vld [vmem:[%s869 + $0x51] sm:$0xff]
      %v1112 = vld [vmem:[%s869 + $0x61] sm:$0xff]
      %v1113 = vld [vmem:[%s869 + $0x69] sm:$0xff]
      %v1114 = vld [vmem:[%s869 + $0x79] sm:$0xff]
      %v1115 = vld [vmem:[%s869 + $0x81] sm:$0xff]
      %v1116 = vld [vmem:[%s869 + $0x91] sm:$0xff]
      %v1117 = vld [vmem:[%s869 + $0x99] sm:$0xff]
      %v1118 = vld [vmem:[%s869 + $0xa9] sm:$0xff]
      %v1119 = vld [vmem:[%s869 + $0xb1] sm:$0xff]
      %s1120 = scalar_lea.vmem %s1, 256
      %v1121 = vld [vmem:[%s1120] sm:$0xff]
      %v1122 = vld [vmem:[%s1120 + $0x8] sm:$0xff]
      %v1123 = vld [vmem:[%s1120 + $0x10] sm:$0xff]
      %v1124 = vld [vmem:[%s1120 + $0x18] sm:$0xff]
      %v1125 = vld [vmem:[%s1120 + $0x20] sm:$0xff]
      %v1126 = vld [vmem:[%s1120 + $0x28] sm:$0xff]
      %v1127 = vld [vmem:[%s1120 + $0x30] sm:$0xff]
      %v1128 = vld [vmem:[%s1120 + $0x38] sm:$0xff]
      %v1130 = vsel %vm246, %v1104, 0
      %v1133 = vsel %vm246, %v1105, 0
      %v1136 = vsel %vm246, %v1106, 0
      %v1139 = vsel %vm246, %v1107, 0
      %v1142 = vsel %vm246, %v1108, 0
      %v1145 = vsel %vm246, %v1109, 0
      %v1148 = vsel %vm246, %v1110, 0
      %v1151 = vsel %vm246, %v1111, 0
      %v1154 = vsel %vm246, %v1112, 0
      %v1157 = vsel %vm246, %v1113, 0
      %v1160 = vsel %vm246, %v1114, 0
      %v1163 = vsel %vm246, %v1115, 0
      %v1166 = vsel %vm246, %v1116, 0
      %v1169 = vsel %vm246, %v1117, 0
      %v1172 = vsel %vm246, %v1118, 0
      %v1175 = vsel %vm246, %v1119, 0
      %1177 = vmatprep.subr.mxu0 0.0
      %1178 = vmatpush1.msra.mxu0 %v1121
      %1179 = vmatprep.subr.mxu0 0.0
      %1180 = vmatpush1.msra.mxu0 %v1122
      %1181 = vmatprep.subr.mxu0 0.0
      %1182 = vmatpush1.msra.mxu0 %v1123
      %1183 = vmatprep.subr.mxu0 0.0
      %1184 = vmatpush1.msra.mxu0 %v1124
      %1185 = vmatprep.subr.mxu0 0.0
      %1186 = vmatpush1.msra.mxu0 %v1125
      %1187 = vmatprep.subr.mxu0 0.0
      %1188 = vmatpush1.msra.mxu0 %v1126
      %1189 = vmatprep.subr.mxu0 0.0
      %1190 = vmatpush1.msra.mxu0 %v1127
      %1191 = vmatprep.subr.mxu0 0.0
      %1192 = vmatpush1.msra.mxu0 %v1128
      %1193 = vmatprep.subr.mxu0 0.0
      %1194 = vmatpush1.msra.mxu0 0.0
      %1195 = vmatprep.subr.mxu0 0.0
      %1196 = vmatpush1.msra.mxu0 0.0
      %1197 = vmatprep.subr.mxu0 0.0
      %1198 = vmatpush1.msra.mxu0 0.0
      %1199 = vmatprep.subr.mxu0 0.0
      %1200 = vmatpush1.msra.mxu0 0.0
      %1201 = vmatprep.subr.mxu0 0.0
      %1202 = vmatpush1.msra.mxu0 0.0
      %1203 = vmatprep.subr.mxu0 0.0
      %1204 = vmatpush1.msra.mxu0 0.0
      %1205 = vmatprep.subr.mxu0 0.0
      %1206 = vmatpush1.msra.mxu0 0.0
      %1207 = vmatprep.subr.mxu0 0.0
      %1208 = vmatpush1.msra.mxu0 0.0
      %1209 = vmatprep.subr.mxu0 0.0
      %1210 = vmatpush1.msra.mxu0 0.0
      %1211 = vmatprep.subr.mxu0 0.0
      %1212 = vmatpush1.msra.mxu0 0.0
      %1213 = vmatprep.subr.mxu0 0.0
      %1214 = vmatpush1.msra.mxu0 0.0
      %1215 = vmatprep.subr.mxu0 0.0
      %1216 = vmatpush1.msra.mxu0 0.0
      %1217 = vmatprep.subr.mxu0 0.0
      %1218 = vmatpush1.msra.mxu0 0.0
      %1219 = vmatprep.subr.mxu0 0.0
      %1220 = vmatpush1.msra.mxu0 0.0
      %1221 = vmatprep.subr.mxu0 0.0
      %1222 = vmatpush1.msra.mxu0 0.0
      %1223 = vmatprep.subr.mxu0 0.0
      %1224 = vmatpush1.msra.mxu0 0.0
      %1225 = vmatprep.subr.mxu0 0.0
      %1226 = vmatpush1.msra.mxu0 0.0
      %1227 = vmatprep.subr.mxu0 0.0
      %1228 = vmatpush1.msra.mxu0 0.0
      %1229 = vmatprep.subr.mxu0 0.0
      %1230 = vmatpush1.msra.mxu0 0.0
      %1231 = vmatprep.subr.mxu0 0.0
      %1232 = vmatpush1.msra.mxu0 0.0
      %1233 = vmatprep.subr.mxu0 0.0
      %1234 = vmatpush1.msra.mxu0 0.0
      %1235 = vmatprep.subr.mxu0 0.0
      %1236 = vmatpush1.msra.mxu0 0.0
      %1237 = vmatprep.subr.mxu0 0.0
      %1238 = vmatpush1.msra.mxu0 0.0
      %1239 = vmatprep.subr.mxu0 0.0
      %1240 = vmatpush1.msra.mxu0 0.0
      %1241 = vmatprep.mubr.f32.mxu0 0.0
      %1242 = vmatmul.mubr.f32.gmra.mrb[0].mxu0 %v1130
      %v1243 = vpop.f32.mrb[0].mxu0
      %v1244 = vadd.f32 0.0, %v1243
      %v1245 = vpop.f32.mrb[0].mxu0
      %1246 = vmatprep.mubr.f32.mxu0 0.0
      %1247 = vmatmul.mubr.f32.gmra.mrb[0].mxu0 %v1133
      %v1248 = vpop.f32.mrb[0].mxu0
      %v1249 = vadd.f32 0.0, %v1248
      %v1250 = vpop.f32.mrb[0].mxu0
      %1251 = vmatprep.mubr.f32.mxu0 0.0
      %1252 = vmatmul.mubr.f32.gmra.mrb[0].mxu0 %v1136
      %v1253 = vpop.f32.mrb[0].mxu0
      %v1254 = vadd.f32 0.0, %v1253
      %v1255 = vpop.f32.mrb[0].mxu0
      %1256 = vmatprep.mubr.f32.mxu0 0.0
      %1257 = vmatmul.mubr.f32.gmra.mrb[0].mxu0 %v1139
      %v1258 = vpop.f32.mrb[0].mxu0
      %v1259 = vadd.f32 0.0, %v1258
      %v1260 = vpop.f32.mrb[0].mxu0
      %1261 = vmatprep.mubr.f32.mxu0 0.0
      %1262 = vmatmul.mubr.f32.gmra.mrb[0].mxu0 %v1142
      %v1263 = vpop.f32.mrb[0].mxu0
      %v1264 = vadd.f32 0.0, %v1263
      %v1265 = vpop.f32.mrb[0].mxu0
      %1266 = vmatprep.mubr.f32.mxu0 0.0
      %1267 = vmatmul.mubr.f32.gmra.mrb[0].mxu0 %v1145
      %v1268 = vpop.f32.mrb[0].mxu0
      %v1269 = vadd.f32 0.0, %v1268
      %v1270 = vpop.f32.mrb[0].mxu0
      %1271 = vmatprep.mubr.f32.mxu0 0.0
      %1272 = vmatmul.mubr.f32.gmra.mrb[0].mxu0 %v1148
      %v1273 = vpop.f32.mrb[0].mxu0
      %v1274 = vadd.f32 0.0, %v1273
      %v1275 = vpop.f32.mrb[0].mxu0
      %1276 = vmatprep.mubr.f32.mxu0 0.0
      %1277 = vmatmul.mubr.f32.gmra.mrb[0].mxu0 %v1151
      %v1278 = vpop.f32.mrb[0].mxu0
      %v1279 = vadd.f32 0.0, %v1278
      %v1280 = vpop.f32.mrb[0].mxu0
      %1281 = vmatprep.mubr.f32.mxu0 0.0
      %1282 = vmatmul.mubr.f32.gmra.mrb[0].mxu0 %v1154
      %v1283 = vpop.f32.mrb[0].mxu0
      %v1284 = vadd.f32 0.0, %v1283
      %v1285 = vpop.f32.mrb[0].mxu0
      %1286 = vmatprep.mubr.f32.mxu0 0.0
      %1287 = vmatmul.mubr.f32.gmra.mrb[0].mxu0 %v1157
      %v1288 = vpop.f32.mrb[0].mxu0
      %v1289 = vadd.f32 0.0, %v1288
      %v1290 = vpop.f32.mrb[0].mxu0
      %1291 = vmatprep.mubr.f32.mxu0 0.0
      %1292 = vmatmul.mubr.f32.gmra.mrb[0].mxu0 %v1160
      %v1293 = vpop.f32.mrb[0].mxu0
      %v1294 = vadd.f32 0.0, %v1293
      %v1295 = vpop.f32.mrb[0].mxu0
      %1296 = vmatprep.mubr.f32.mxu0 0.0
      %1297 = vmatmul.mubr.f32.gmra.mrb[0].mxu0 %v1163
      %v1298 = vpop.f32.mrb[0].mxu0
      %v1299 = vadd.f32 0.0, %v1298
      %v1300 = vpop.f32.mrb[0].mxu0
      %1301 = vmatprep.mubr.f32.mxu0 0.0
      %1302 = vmatmul.mubr.f32.gmra.mrb[0].mxu0 %v1166
      %v1303 = vpop.f32.mrb[0].mxu0
      %v1304 = vadd.f32 0.0, %v1303
      %v1305 = vpop.f32.mrb[0].mxu0
      %1306 = vmatprep.mubr.f32.mxu0 0.0
      %1307 = vmatmul.mubr.f32.gmra.mrb[0].mxu0 %v1169
      %v1308 = vpop.f32.mrb[0].mxu0
      %v1309 = vadd.f32 0.0, %v1308
      %v1310 = vpop.f32.mrb[0].mxu0
      %1311 = vmatprep.mubr.f32.mxu0 0.0
      %1312 = vmatmul.mubr.f32.gmra.mrb[0].mxu0 %v1172
      %v1313 = vpop.f32.mrb[0].mxu0
      %v1314 = vadd.f32 0.0, %v1313
      %v1315 = vpop.f32.mrb[0].mxu0
      %1316 = vmatprep.mubr.f32.mxu0 0.0
      %1317 = vmatmul.mubr.f32.gmra.mrb[0].mxu0 %v1175
      %v1318 = vpop.f32.mrb[0].mxu0
      %v1319 = vadd.f32 0.0, %v1318
      %v1320 = vpop.f32.mrb[0].mxu0
      %1321 = vdwg.mxu0
      %v1322 = vadd.f32 %v1088, %v1244
      %v1323 = vadd.f32 %v1089, %v1249
      %v1324 = vadd.f32 %v1090, %v1254
      %v1325 = vadd.f32 %v1091, %v1259
      %v1326 = vadd.f32 %v1092, %v1264
      %v1327 = vadd.f32 %v1093, %v1269
      %v1328 = vadd.f32 %v1094, %v1274
      %v1329 = vadd.f32 %v1095, %v1279
      %v1330 = vadd.f32 %v1096, %v1284
      %v1331 = vadd.f32 %v1097, %v1289
      %v1332 = vadd.f32 %v1098, %v1294
      %v1333 = vadd.f32 %v1099, %v1299
      %v1334 = vadd.f32 %v1100, %v1304
      %v1335 = vadd.f32 %v1101, %v1309
      %v1336 = vadd.f32 %v1102, %v1314
      %v1337 = vadd.f32 %v1103, %v1319
      %v1338 = vld [vmem:[%s869 + $0x2] sm:$0xff]
      %v1339 = vld [vmem:[%s869 + $0xa] sm:$0xff]
      %v1340 = vld [vmem:[%s869 + $0x1a] sm:$0xff]
      %v1341 = vld [vmem:[%s869 + $0x22] sm:$0xff]
      %v1342 = vld [vmem:[%s869 + $0x32] sm:$0xff]
      %v1343 = vld [vmem:[%s869 + $0x3a] sm:$0xff]
      %v1344 = vld [vmem:[%s869 + $0x4a] sm:$0xff]
      %v1345 = vld [vmem:[%s869 + $0x52] sm:$0xff]
      %v1346 = vld [vmem:[%s869 + $0x62] sm:$0xff]
      %v1347 = vld [vmem:[%s869 + $0x6a] sm:$0xff]
      %v1348 = vld [vmem:[%s869 + $0x7a] sm:$0xff]
      %v1349 = vld [vmem:[%s869 + $0x82] sm:$0xff]
      %v1350 = vld [vmem:[%s869 + $0x92] sm:$0xff]
      %v1351 = vld [vmem:[%s869 + $0x9a] sm:$0xff]
      %v1352 = vld [vmem:[%s869 + $0xaa] sm:$0xff]
      %v1353 = vld [vmem:[%s869 + $0xb2] sm:$0xff]
      %s1354 = scalar_lea.vmem %s1, 320
      %v1355 = vld [vmem:[%s1354] sm:$0xff]
      %v1356 = vld [vmem:[%s1354 + $0x8] sm:$0xff]
      %v1357 = vld [vmem:[%s1354 + $0x10] sm:$0xff]
      %v1358 = vld [vmem:[%s1354 + $0x18] sm:$0xff]
      %v1359 = vld [vmem:[%s1354 + $0x20] sm:$0xff]
      %v1360 = vld [vmem:[%s1354 + $0x28] sm:$0xff]
      %v1361 = vld [vmem:[%s1354 + $0x30] sm:$0xff]
      %v1362 = vld [vmem:[%s1354 + $0x38] sm:$0xff]
      %v1364 = vsel %vm246, %v1338, 0
      %v1367 = vsel %vm246, %v1339, 0
      %v1370 = vsel %vm246, %v1340, 0
      %v1373 = vsel %vm246, %v1341, 0
      %v1376 = vsel %vm246, %v1342, 0
      %v1379 = vsel %vm246, %v1343, 0
      %v1382 = vsel %vm246, %v1344, 0
      %v1385 = vsel %vm246, %v1345, 0
      %v1388 = vsel %vm246, %v1346, 0
      %v1391 = vsel %vm246, %v1347, 0
      %v1394 = vsel %vm246, %v1348, 0
      %v1397 = vsel %vm246, %v1349, 0
      %v1400 = vsel %vm246, %v1350, 0
      %v1403 = vsel %vm246, %v1351, 0
      %v1406 = vsel %vm246, %v1352, 0
      %v1409 = vsel %vm246, %v1353, 0
      %1411 = vmatprep.subr.mxu0 0.0
      %1412 = vmatpush1.msra.mxu0 %v1355
      %1413 = vmatprep.subr.mxu0 0.0
      %1414 = vmatpush1.msra.mxu0 %v1356
      %1415 = vmatprep.subr.mxu0 0.0
      %1416 = vmatpush1.msra.mxu0 %v1357
      %1417 = vmatprep.subr.mxu0 0.0
      %1418 = vmatpush1.msra.mxu0 %v1358
      %1419 = vmatprep.subr.mxu0 0.0
      %1420 = vmatpush1.msra.mxu0 %v1359
      %1421 = vmatprep.subr.mxu0 0.0
      %1422 = vmatpush1.msra.mxu0 %v1360
      %1423 = vmatprep.subr.mxu0 0.0
      %1424 = vmatpush1.msra.mxu0 %v1361
      %1425 = vmatprep.subr.mxu0 0.0
      %1426 = vmatpush1.msra.mxu0 %v1362
      %1427 = vmatprep.subr.mxu0 0.0
      %1428 = vmatpush1.msra.mxu0 0.0
      %1429 = vmatprep.subr.mxu0 0.0
      %1430 = vmatpush1.msra.mxu0 0.0
      %1431 = vmatprep.subr.mxu0 0.0
      %1432 = vmatpush1.msra.mxu0 0.0
      %1433 = vmatprep.subr.mxu0 0.0
      %1434 = vmatpush1.msra.mxu0 0.0
      %1435 = vmatprep.subr.mxu0 0.0
      %1436 = vmatpush1.msra.mxu0 0.0
      %1437 = vmatprep.subr.mxu0 0.0
      %1438 = vmatpush1.msra.mxu0 0.0
      %1439 = vmatprep.subr.mxu0 0.0
      %1440 = vmatpush1.msra.mxu0 0.0
      %1441 = vmatprep.subr.mxu0 0.0
      %1442 = vmatpush1.msra.mxu0 0.0
      %1443 = vmatprep.subr.mxu0 0.0
      %1444 = vmatpush1.msra.mxu0 0.0
      %1445 = vmatprep.subr.mxu0 0.0
      %1446 = vmatpush1.msra.mxu0 0.0
      %1447 = vmatprep.subr.mxu0 0.0
      %1448 = vmatpush1.msra.mxu0 0.0
      %1449 = vmatprep.subr.mxu0 0.0
      %1450 = vmatpush1.msra.mxu0 0.0
      %1451 = vmatprep.subr.mxu0 0.0
      %1452 = vmatpush1.msra.mxu0 0.0
      %1453 = vmatprep.subr.mxu0 0.0
      %1454 = vmatpush1.msra.mxu0 0.0
      %1455 = vmatprep.subr.mxu0 0.0
      %1456 = vmatpush1.msra.mxu0 0.0
      %1457 = vmatprep.subr.mxu0 0.0
      %1458 = vmatpush1.msra.mxu0 0.0
      %1459 = vmatprep.subr.mxu0 0.0
      %1460 = vmatpush1.msra.mxu0 0.0
      %1461 = vmatprep.subr.mxu0 0.0
      %1462 = vmatpush1.msra.mxu0 0.0
      %1463 = vmatprep.subr.mxu0 0.0
      %1464 = vmatpush1.msra.mxu0 0.0
      %1465 = vmatprep.subr.mxu0 0.0
      %1466 = vmatpush1.msra.mxu0 0.0
      %1467 = vmatprep.subr.mxu0 0.0
      %1468 = vmatpush1.msra.mxu0 0.0
      %1469 = vmatprep.subr.mxu0 0.0
      %1470 = vmatpush1.msra.mxu0 0.0
      %1471 = vmatprep.subr.mxu0 0.0
      %1472 = vmatpush1.msra.mxu0 0.0
      %1473 = vmatprep.subr.mxu0 0.0
      %1474 = vmatpush1.msra.mxu0 0.0
      %1475 = vmatprep.mubr.f32.mxu0 0.0
      %1476 = vmatmul.mubr.f32.gmra.mrb[0].mxu0 %v1364
      %v1477 = vpop.f32.mrb[0].mxu0
      %v1478 = vadd.f32 0.0, %v1477
      %v1479 = vpop.f32.mrb[0].mxu0
      %1480 = vmatprep.mubr.f32.mxu0 0.0
      %1481 = vmatmul.mubr.f32.gmra.mrb[0].mxu0 %v1367
      %v1482 = vpop.f32.mrb[0].mxu0
      %v1483 = vadd.f32 0.0, %v1482
      %v1484 = vpop.f32.mrb[0].mxu0
      %1485 = vmatprep.mubr.f32.mxu0 0.0
      %1486 = vmatmul.mubr.f32.gmra.mrb[0].mxu0 %v1370
      %v1487 = vpop.f32.mrb[0].mxu0
      %v1488 = vadd.f32 0.0, %v1487
      %v1489 = vpop.f32.mrb[0].mxu0
      %1490 = vmatprep.mubr.f32.mxu0 0.0
      %1491 = vmatmul.mubr.f32.gmra.mrb[0].mxu0 %v1373
      %v1492 = vpop.f32.mrb[0].mxu0
      %v1493 = vadd.f32 0.0, %v1492
      %v1494 = vpop.f32.mrb[0].mxu0
      %1495 = vmatprep.mubr.f32.mxu0 0.0
      %1496 = vmatmul.mubr.f32.gmra.mrb[0].mxu0 %v1376
      %v1497 = vpop.f32.mrb[0].mxu0
      %v1498 = vadd.f32 0.0, %v1497
      %v1499 = vpop.f32.mrb[0].mxu0
      %1500 = vmatprep.mubr.f32.mxu0 0.0
      %1501 = vmatmul.mubr.f32.gmra.mrb[0].mxu0 %v1379
      %v1502 = vpop.f32.mrb[0].mxu0
      %v1503 = vadd.f32 0.0, %v1502
      %v1504 = vpop.f32.mrb[0].mxu0
      %1505 = vmatprep.mubr.f32.mxu0 0.0
      %1506 = vmatmul.mubr.f32.gmra.mrb[0].mxu0 %v1382
      %v1507 = vpop.f32.mrb[0].mxu0
      %v1508 = vadd.f32 0.0, %v1507
      %v1509 = vpop.f32.mrb[0].mxu0
      %1510 = vmatprep.mubr.f32.mxu0 0.0
      %1511 = vmatmul.mubr.f32.gmra.mrb[0].mxu0 %v1385
      %v1512 = vpop.f32.mrb[0].mxu0
      %v1513 = vadd.f32 0.0, %v1512
      %v1514 = vpop.f32.mrb[0].mxu0
      %1515 = vmatprep.mubr.f32.mxu0 0.0
      %1516 = vmatmul.mubr.f32.gmra.mrb[0].mxu0 %v1388
      %v1517 = vpop.f32.mrb[0].mxu0
      %v1518 = vadd.f32 0.0, %v1517
      %v1519 = vpop.f32.mrb[0].mxu0
      %1520 = vmatprep.mubr.f32.mxu0 0.0
      %1521 = vmatmul.mubr.f32.gmra.mrb[0].mxu0 %v1391
      %v1522 = vpop.f32.mrb[0].mxu0
      %v1523 = vadd.f32 0.0, %v1522
      %v1524 = vpop.f32.mrb[0].mxu0
      %1525 = vmatprep.mubr.f32.mxu0 0.0
      %1526 = vmatmul.mubr.f32.gmra.mrb[0].mxu0 %v1394
      %v1527 = vpop.f32.mrb[0].mxu0
      %v1528 = vadd.f32 0.0, %v1527
      %v1529 = vpop.f32.mrb[0].mxu0
      %1530 = vmatprep.mubr.f32.mxu0 0.0
      %1531 = vmatmul.mubr.f32.gmra.mrb[0].mxu0 %v1397
      %v1532 = vpop.f32.mrb[0].mxu0
      %v1533 = vadd.f32 0.0, %v1532
      %v1534 = vpop.f32.mrb[0].mxu0
      %1535 = vmatprep.mubr.f32.mxu0 0.0
      %1536 = vmatmul.mubr.f32.gmra.mrb[0].mxu0 %v1400
      %v1537 = vpop.f32.mrb[0].mxu0
      %v1538 = vadd.f32 0.0, %v1537
      %v1539 = vpop.f32.mrb[0].mxu0
      %1540 = vmatprep.mubr.f32.mxu0 0.0
      %1541 = vmatmul.mubr.f32.gmra.mrb[0].mxu0 %v1403
      %v1542 = vpop.f32.mrb[0].mxu0
      %v1543 = vadd.f32 0.0, %v1542
      %v1544 = vpop.f32.mrb[0].mxu0
      %1545 = vmatprep.mubr.f32.mxu0 0.0
      %1546 = vmatmul.mubr.f32.gmra.mrb[0].mxu0 %v1406
      %v1547 = vpop.f32.mrb[0].mxu0
      %v1548 = vadd.f32 0.0, %v1547
      %v1549 = vpop.f32.mrb[0].mxu0
      %1550 = vmatprep.mubr.f32.mxu0 0.0
      %1551 = vmatmul.mubr.f32.gmra.mrb[0].mxu0 %v1409
      %v1552 = vpop.f32.mrb[0].mxu0
      %v1553 = vadd.f32 0.0, %v1552
      %v1554 = vpop.f32.mrb[0].mxu0
      %1555 = vdwg.mxu0
      %v1556 = vadd.f32 %v1322, %v1478
      %v1557 = vadd.f32 %v1323, %v1483
      %v1558 = vadd.f32 %v1324, %v1488
      %v1559 = vadd.f32 %v1325, %v1493
      %v1560 = vadd.f32 %v1326, %v1498
      %v1561 = vadd.f32 %v1327, %v1503
      %v1562 = vadd.f32 %v1328, %v1508
      %v1563 = vadd.f32 %v1329, %v1513
      %v1564 = vadd.f32 %v1330, %v1518
      %v1565 = vadd.f32 %v1331, %v1523
      %v1566 = vadd.f32 %v1332, %v1528
      %v1567 = vadd.f32 %v1333, %v1533
      %v1568 = vadd.f32 %v1334, %v1538
      %v1569 = vadd.f32 %v1335, %v1543
      %v1570 = vadd.f32 %v1336, %v1548
      %v1571 = vadd.f32 %v1337, %v1553
      %s1572 = sadd.s32 %s194, 2
      %s1573 = smul.u32 %s1572, 24
      %s1574 = scalar_lea.vmem %s183, %s1573
      %v1575 = vld [vmem:[%s1574] sm:$0xff]
      %v1576 = vld [vmem:[%s1574 + $0x8] sm:$0xff]
      %v1577 = vld [vmem:[%s1574 + $0x18] sm:$0xff]
      %v1578 = vld [vmem:[%s1574 + $0x20] sm:$0xff]
      %v1579 = vld [vmem:[%s1574 + $0x30] sm:$0xff]
      %v1580 = vld [vmem:[%s1574 + $0x38] sm:$0xff]
      %v1581 = vld [vmem:[%s1574 + $0x48] sm:$0xff]
      %v1582 = vld [vmem:[%s1574 + $0x50] sm:$0xff]
      %v1583 = vld [vmem:[%s1574 + $0x60] sm:$0xff]
      %v1584 = vld [vmem:[%s1574 + $0x68] sm:$0xff]
      %v1585 = vld [vmem:[%s1574 + $0x78] sm:$0xff]
      %v1586 = vld [vmem:[%s1574 + $0x80] sm:$0xff]
      %v1587 = vld [vmem:[%s1574 + $0x90] sm:$0xff]
      %v1588 = vld [vmem:[%s1574 + $0x98] sm:$0xff]
      %v1589 = vld [vmem:[%s1574 + $0xa8] sm:$0xff]
      %v1590 = vld [vmem:[%s1574 + $0xb0] sm:$0xff]
      %s1591 = scalar_lea.vmem %s1, 384
      %v1592 = vld [vmem:[%s1591] sm:$0xff]
      %v1593 = vld [vmem:[%s1591 + $0x8] sm:$0xff]
      %v1594 = vld [vmem:[%s1591 + $0x10] sm:$0xff]
      %v1595 = vld [vmem:[%s1591 + $0x18] sm:$0xff]
      %v1596 = vld [vmem:[%s1591 + $0x20] sm:$0xff]
      %v1597 = vld [vmem:[%s1591 + $0x28] sm:$0xff]
      %v1598 = vld [vmem:[%s1591 + $0x30] sm:$0xff]
      %v1599 = vld [vmem:[%s1591 + $0x38] sm:$0xff]
      %v1601 = vsel %vm246, %v1575, 0
      %v1604 = vsel %vm246, %v1576, 0
      %v1607 = vsel %vm246, %v1577, 0
      %v1610 = vsel %vm246, %v1578, 0
      %v1613 = vsel %vm246, %v1579, 0
      %v1616 = vsel %vm246, %v1580, 0
      %v1619 = vsel %vm246, %v1581, 0
      %v1622 = vsel %vm246, %v1582, 0
      %v1625 = vsel %vm246, %v1583, 0
      %v1628 = vsel %vm246, %v1584, 0
      %v1631 = vsel %vm246, %v1585, 0
      %v1634 = vsel %vm246, %v1586, 0
      %v1637 = vsel %vm246, %v1587, 0
      %v1640 = vsel %vm246, %v1588, 0
      %v1643 = vsel %vm246, %v1589, 0
      %v1646 = vsel %vm246, %v1590, 0
      %1648 = vmatprep.subr.mxu0 0.0
      %1649 = vmatpush1.msra.mxu0 %v1592
      %1650 = vmatprep.subr.mxu0 0.0
      %1651 = vmatpush1.msra.mxu0 %v1593
      %1652 = vmatprep.subr.mxu0 0.0
      %1653 = vmatpush1.msra.mxu0 %v1594
      %1654 = vmatprep.subr.mxu0 0.0
      %1655 = vmatpush1.msra.mxu0 %v1595
      %1656 = vmatprep.subr.mxu0 0.0
      %1657 = vmatpush1.msra.mxu0 %v1596
      %1658 = vmatprep.subr.mxu0 0.0
      %1659 = vmatpush1.msra.mxu0 %v1597
      %1660 = vmatprep.subr.mxu0 0.0
      %1661 = vmatpush1.msra.mxu0 %v1598
      %1662 = vmatprep.subr.mxu0 0.0
      %1663 = vmatpush1.msra.mxu0 %v1599
      %1664 = vmatprep.subr.mxu0 0.0
      %1665 = vmatpush1.msra.mxu0 0.0
      %1666 = vmatprep.subr.mxu0 0.0
      %1667 = vmatpush1.msra.mxu0 0.0
      %1668 = vmatprep.subr.mxu0 0.0
      %1669 = vmatpush1.msra.mxu0 0.0
      %1670 = vmatprep.subr.mxu0 0.0
      %1671 = vmatpush1.msra.mxu0 0.0
      %1672 = vmatprep.subr.mxu0 0.0
      %1673 = vmatpush1.msra.mxu0 0.0
      %1674 = vmatprep.subr.mxu0 0.0
      %1675 = vmatpush1.msra.mxu0 0.0
      %1676 = vmatprep.subr.mxu0 0.0
      %1677 = vmatpush1.msra.mxu0 0.0
      %1678 = vmatprep.subr.mxu0 0.0
      %1679 = vmatpush1.msra.mxu0 0.0
      %1680 = vmatprep.subr.mxu0 0.0
      %1681 = vmatpush1.msra.mxu0 0.0
      %1682 = vmatprep.subr.mxu0 0.0
      %1683 = vmatpush1.msra.mxu0 0.0
      %1684 = vmatprep.subr.mxu0 0.0
      %1685 = vmatpush1.msra.mxu0 0.0
      %1686 = vmatprep.subr.mxu0 0.0
      %1687 = vmatpush1.msra.mxu0 0.0
      %1688 = vmatprep.subr.mxu0 0.0
      %1689 = vmatpush1.msra.mxu0 0.0
      %1690 = vmatprep.subr.mxu0 0.0
      %1691 = vmatpush1.msra.mxu0 0.0
      %1692 = vmatprep.subr.mxu0 0.0
      %1693 = vmatpush1.msra.mxu0 0.0
      %1694 = vmatprep.subr.mxu0 0.0
      %1695 = vmatpush1.msra.mxu0 0.0
      %1696 = vmatprep.subr.mxu0 0.0
      %1697 = vmatpush1.msra.mxu0 0.0
      %1698 = vmatprep.subr.mxu0 0.0
      %1699 = vmatpush1.msra.mxu0 0.0
      %1700 = vmatprep.subr.mxu0 0.0
      %1701 = vmatpush1.msra.mxu0 0.0
      %1702 = vmatprep.subr.mxu0 0.0
      %1703 = vmatpush1.msra.mxu0 0.0
      %1704 = vmatprep.subr.mxu0 0.0
      %1705 = vmatpush1.msra.mxu0 0.0
      %1706 = vmatprep.subr.mxu0 0.0
      %1707 = vmatpush1.msra.mxu0 0.0
      %1708 = vmatprep.subr.mxu0 0.0
      %1709 = vmatpush1.msra.mxu0 0.0
      %1710 = vmatprep.subr.mxu0 0.0
      %1711 = vmatpush1.msra.mxu0 0.0
      %1712 = vmatprep.mubr.f32.mxu0 0.0
      %1713 = vmatmul.mubr.f32.gmra.mrb[0].mxu0 %v1601
      %v1714 = vpop.f32.mrb[0].mxu0
      %v1715 = vadd.f32 0.0, %v1714
      %v1716 = vpop.f32.mrb[0].mxu0
      %1717 = vmatprep.mubr.f32.mxu0 0.0
      %1718 = vmatmul.mubr.f32.gmra.mrb[0].mxu0 %v1604
      %v1719 = vpop.f32.mrb[0].mxu0
      %v1720 = vadd.f32 0.0, %v1719
      %v1721 = vpop.f32.mrb[0].mxu0
      %1722 = vmatprep.mubr.f32.mxu0 0.0
      %1723 = vmatmul.mubr.f32.gmra.mrb[0].mxu0 %v1607
      %v1724 = vpop.f32.mrb[0].mxu0
      %v1725 = vadd.f32 0.0, %v1724
      %v1726 = vpop.f32.mrb[0].mxu0
      %1727 = vmatprep.mubr.f32.mxu0 0.0
      %1728 = vmatmul.mubr.f32.gmra.mrb[0].mxu0 %v1610
      %v1729 = vpop.f32.mrb[0].mxu0
      %v1730 = vadd.f32 0.0, %v1729
      %v1731 = vpop.f32.mrb[0].mxu0
      %1732 = vmatprep.mubr.f32.mxu0 0.0
      %1733 = vmatmul.mubr.f32.gmra.mrb[0].mxu0 %v1613
      %v1734 = vpop.f32.mrb[0].mxu0
      %v1735 = vadd.f32 0.0, %v1734
      %v1736 = vpop.f32.mrb[0].mxu0
      %1737 = vmatprep.mubr.f32.mxu0 0.0
      %1738 = vmatmul.mubr.f32.gmra.mrb[0].mxu0 %v1616
      %v1739 = vpop.f32.mrb[0].mxu0
      %v1740 = vadd.f32 0.0, %v1739
      %v1741 = vpop.f32.mrb[0].mxu0
      %1742 = vmatprep.mubr.f32.mxu0 0.0
      %1743 = vmatmul.mubr.f32.gmra.mrb[0].mxu0 %v1619
      %v1744 = vpop.f32.mrb[0].mxu0
      %v1745 = vadd.f32 0.0, %v1744
      %v1746 = vpop.f32.mrb[0].mxu0
      %1747 = vmatprep.mubr.f32.mxu0 0.0
      %1748 = vmatmul.mubr.f32.gmra.mrb[0].mxu0 %v1622
      %v1749 = vpop.f32.mrb[0].mxu0
      %v1750 = vadd.f32 0.0, %v1749
      %v1751 = vpop.f32.mrb[0].mxu0
      %1752 = vmatprep.mubr.f32.mxu0 0.0
      %1753 = vmatmul.mubr.f32.gmra.mrb[0].mxu0 %v1625
      %v1754 = vpop.f32.mrb[0].mxu0
      %v1755 = vadd.f32 0.0, %v1754
      %v1756 = vpop.f32.mrb[0].mxu0
      %1757 = vmatprep.mubr.f32.mxu0 0.0
      %1758 = vmatmul.mubr.f32.gmra.mrb[0].mxu0 %v1628
      %v1759 = vpop.f32.mrb[0].mxu0
      %v1760 = vadd.f32 0.0, %v1759
      %v1761 = vpop.f32.mrb[0].mxu0
      %1762 = vmatprep.mubr.f32.mxu0 0.0
      %1763 = vmatmul.mubr.f32.gmra.mrb[0].mxu0 %v1631
      %v1764 = vpop.f32.mrb[0].mxu0
      %v1765 = vadd.f32 0.0, %v1764
      %v1766 = vpop.f32.mrb[0].mxu0
      %1767 = vmatprep.mubr.f32.mxu0 0.0
      %1768 = vmatmul.mubr.f32.gmra.mrb[0].mxu0 %v1634
      %v1769 = vpop.f32.mrb[0].mxu0
      %v1770 = vadd.f32 0.0, %v1769
      %v1771 = vpop.f32.mrb[0].mxu0
      %1772 = vmatprep.mubr.f32.mxu0 0.0
      %1773 = vmatmul.mubr.f32.gmra.mrb[0].mxu0 %v1637
      %v1774 = vpop.f32.mrb[0].mxu0
      %v1775 = vadd.f32 0.0, %v1774
      %v1776 = vpop.f32.mrb[0].mxu0
      %1777 = vmatprep.mubr.f32.mxu0 0.0
      %1778 = vmatmul.mubr.f32.gmra.mrb[0].mxu0 %v1640
      %v1779 = vpop.f32.mrb[0].mxu0
      %v1780 = vadd.f32 0.0, %v1779
      %v1781 = vpop.f32.mrb[0].mxu0
      %1782 = vmatprep.mubr.f32.mxu0 0.0
      %1783 = vmatmul.mubr.f32.gmra.mrb[0].mxu0 %v1643
      %v1784 = vpop.f32.mrb[0].mxu0
      %v1785 = vadd.f32 0.0, %v1784
      %v1786 = vpop.f32.mrb[0].mxu0
      %1787 = vmatprep.mubr.f32.mxu0 0.0
      %1788 = vmatmul.mubr.f32.gmra.mrb[0].mxu0 %v1646
      %v1789 = vpop.f32.mrb[0].mxu0
      %v1790 = vadd.f32 0.0, %v1789
      %v1791 = vpop.f32.mrb[0].mxu0
      %1792 = vdwg.mxu0
      %v1793 = vadd.f32 %v1556, %v1715
      %v1794 = vadd.f32 %v1557, %v1720
      %v1795 = vadd.f32 %v1558, %v1725
      %v1796 = vadd.f32 %v1559, %v1730
      %v1797 = vadd.f32 %v1560, %v1735
      %v1798 = vadd.f32 %v1561, %v1740
      %v1799 = vadd.f32 %v1562, %v1745
      %v1800 = vadd.f32 %v1563, %v1750
      %v1801 = vadd.f32 %v1564, %v1755
      %v1802 = vadd.f32 %v1565, %v1760
      %v1803 = vadd.f32 %v1566, %v1765
      %v1804 = vadd.f32 %v1567, %v1770
      %v1805 = vadd.f32 %v1568, %v1775
      %v1806 = vadd.f32 %v1569, %v1780
      %v1807 = vadd.f32 %v1570, %v1785
      %v1808 = vadd.f32 %v1571, %v1790
      %v1809 = vld [vmem:[%s1574 + $0x1] sm:$0xff]
      %v1810 = vld [vmem:[%s1574 + $0x9] sm:$0xff]
      %v1811 = vld [vmem:[%s1574 + $0x19] sm:$0xff]
      %v1812 = vld [vmem:[%s1574 + $0x21] sm:$0xff]
      %v1813 = vld [vmem:[%s1574 + $0x31] sm:$0xff]
      %v1814 = vld [vmem:[%s1574 + $0x39] sm:$0xff]
      %v1815 = vld [vmem:[%s1574 + $0x49] sm:$0xff]
      %v1816 = vld [vmem:[%s1574 + $0x51] sm:$0xff]
      %v1817 = vld [vmem:[%s1574 + $0x61] sm:$0xff]
      %v1818 = vld [vmem:[%s1574 + $0x69] sm:$0xff]
      %v1819 = vld [vmem:[%s1574 + $0x79] sm:$0xff]
      %v1820 = vld [vmem:[%s1574 + $0x81] sm:$0xff]
      %v1821 = vld [vmem:[%s1574 + $0x91] sm:$0xff]
      %v1822 = vld [vmem:[%s1574 + $0x99] sm:$0xff]
      %v1823 = vld [vmem:[%s1574 + $0xa9] sm:$0xff]
      %v1824 = vld [vmem:[%s1574 + $0xb1] sm:$0xff]
      %s1825 = scalar_lea.vmem %s1, 448
      %v1826 = vld [vmem:[%s1825] sm:$0xff]
      %v1827 = vld [vmem:[%s1825 + $0x8] sm:$0xff]
      %v1828 = vld [vmem:[%s1825 + $0x10] sm:$0xff]
      %v1829 = vld [vmem:[%s1825 + $0x18] sm:$0xff]
      %v1830 = vld [vmem:[%s1825 + $0x20] sm:$0xff]
      %v1831 = vld [vmem:[%s1825 + $0x28] sm:$0xff]
      %v1832 = vld [vmem:[%s1825 + $0x30] sm:$0xff]
      %v1833 = vld [vmem:[%s1825 + $0x38] sm:$0xff]
      %v1835 = vsel %vm246, %v1809, 0
      %v1838 = vsel %vm246, %v1810, 0
      %v1841 = vsel %vm246, %v1811, 0
      %v1844 = vsel %vm246, %v1812, 0
      %v1847 = vsel %vm246, %v1813, 0
      %v1850 = vsel %vm246, %v1814, 0
      %v1853 = vsel %vm246, %v1815, 0
      %v1856 = vsel %vm246, %v1816, 0
      %v1859 = vsel %vm246, %v1817, 0
      %v1862 = vsel %vm246, %v1818, 0
      %v1865 = vsel %vm246, %v1819, 0
      %v1868 = vsel %vm246, %v1820, 0
      %v1871 = vsel %vm246, %v1821, 0
      %v1874 = vsel %vm246, %v1822, 0
      %v1877 = vsel %vm246, %v1823, 0
      %v1880 = vsel %vm246, %v1824, 0
      %1882 = vmatprep.subr.mxu0 0.0
      %1883 = vmatpush1.msra.mxu0 %v1826
      %1884 = vmatprep.subr.mxu0 0.0
      %1885 = vmatpush1.msra.mxu0 %v1827
      %1886 = vmatprep.subr.mxu0 0.0
      %1887 = vmatpush1.msra.mxu0 %v1828
      %1888 = vmatprep.subr.mxu0 0.0
      %1889 = vmatpush1.msra.mxu0 %v1829
      %1890 = vmatprep.subr.mxu0 0.0
      %1891 = vmatpush1.msra.mxu0 %v1830
      %1892 = vmatprep.subr.mxu0 0.0
      %1893 = vmatpush1.msra.mxu0 %v1831
      %1894 = vmatprep.subr.mxu0 0.0
      %1895 = vmatpush1.msra.mxu0 %v1832
      %1896 = vmatprep.subr.mxu0 0.0
      %1897 = vmatpush1.msra.mxu0 %v1833
      %1898 = vmatprep.subr.mxu0 0.0
      %1899 = vmatpush1.msra.mxu0 0.0
      %1900 = vmatprep.subr.mxu0 0.0
      %1901 = vmatpush1.msra.mxu0 0.0
      %1902 = vmatprep.subr.mxu0 0.0
      %1903 = vmatpush1.msra.mxu0 0.0
      %1904 = vmatprep.subr.mxu0 0.0
      %1905 = vmatpush1.msra.mxu0 0.0
      %1906 = vmatprep.subr.mxu0 0.0
      %1907 = vmatpush1.msra.mxu0 0.0
      %1908 = vmatprep.subr.mxu0 0.0
      %1909 = vmatpush1.msra.mxu0 0.0
      %1910 = vmatprep.subr.mxu0 0.0
      %1911 = vmatpush1.msra.mxu0 0.0
      %1912 = vmatprep.subr.mxu0 0.0
      %1913 = vmatpush1.msra.mxu0 0.0
      %1914 = vmatprep.subr.mxu0 0.0
      %1915 = vmatpush1.msra.mxu0 0.0
      %1916 = vmatprep.subr.mxu0 0.0
      %1917 = vmatpush1.msra.mxu0 0.0
      %1918 = vmatprep.subr.mxu0 0.0
      %1919 = vmatpush1.msra.mxu0 0.0
      %1920 = vmatprep.subr.mxu0 0.0
      %1921 = vmatpush1.msra.mxu0 0.0
      %1922 = vmatprep.subr.mxu0 0.0
      %1923 = vmatpush1.msra.mxu0 0.0
      %1924 = vmatprep.subr.mxu0 0.0
      %1925 = vmatpush1.msra.mxu0 0.0
      %1926 = vmatprep.subr.mxu0 0.0
      %1927 = vmatpush1.msra.mxu0 0.0
      %1928 = vmatprep.subr.mxu0 0.0
      %1929 = vmatpush1.msra.mxu0 0.0
      %1930 = vmatprep.subr.mxu0 0.0
      %1931 = vmatpush1.msra.mxu0 0.0
      %1932 = vmatprep.subr.mxu0 0.0
      %1933 = vmatpush1.msra.mxu0 0.0
      %1934 = vmatprep.subr.mxu0 0.0
      %1935 = vmatpush1.msra.mxu0 0.0
      %1936 = vmatprep.subr.mxu0 0.0
      %1937 = vmatpush1.msra.mxu0 0.0
      %1938 = vmatprep.subr.mxu0 0.0
      %1939 = vmatpush1.msra.mxu0 0.0
      %1940 = vmatprep.subr.mxu0 0.0
      %1941 = vmatpush1.msra.mxu0 0.0
      %1942 = vmatprep.subr.mxu0 0.0
      %1943 = vmatpush1.msra.mxu0 0.0
      %1944 = vmatprep.subr.mxu0 0.0
      %1945 = vmatpush1.msra.mxu0 0.0
      %1946 = vmatprep.mubr.f32.mxu0 0.0
      %1947 = vmatmul.mubr.f32.gmra.mrb[0].mxu0 %v1835
      %v1948 = vpop.f32.mrb[0].mxu0
      %v1949 = vadd.f32 0.0, %v1948
      %v1950 = vpop.f32.mrb[0].mxu0
      %1951 = vmatprep.mubr.f32.mxu0 0.0
      %1952 = vmatmul.mubr.f32.gmra.mrb[0].mxu0 %v1838
      %v1953 = vpop.f32.mrb[0].mxu0
      %v1954 = vadd.f32 0.0, %v1953
      %v1955 = vpop.f32.mrb[0].mxu0
      %1956 = vmatprep.mubr.f32.mxu0 0.0
      %1957 = vmatmul.mubr.f32.gmra.mrb[0].mxu0 %v1841
      %v1958 = vpop.f32.mrb[0].mxu0
      %v1959 = vadd.f32 0.0, %v1958
      %v1960 = vpop.f32.mrb[0].mxu0
      %1961 = vmatprep.mubr.f32.mxu0 0.0
      %1962 = vmatmul.mubr.f32.gmra.mrb[0].mxu0 %v1844
      %v1963 = vpop.f32.mrb[0].mxu0
      %v1964 = vadd.f32 0.0, %v1963
      %v1965 = vpop.f32.mrb[0].mxu0
      %1966 = vmatprep.mubr.f32.mxu0 0.0
      %1967 = vmatmul.mubr.f32.gmra.mrb[0].mxu0 %v1847
      %v1968 = vpop.f32.mrb[0].mxu0
      %v1969 = vadd.f32 0.0, %v1968
      %v1970 = vpop.f32.mrb[0].mxu0
      %1971 = vmatprep.mubr.f32.mxu0 0.0
      %1972 = vmatmul.mubr.f32.gmra.mrb[0].mxu0 %v1850
      %v1973 = vpop.f32.mrb[0].mxu0
      %v1974 = vadd.f32 0.0, %v1973
      %v1975 = vpop.f32.mrb[0].mxu0
      %1976 = vmatprep.mubr.f32.mxu0 0.0
      %1977 = vmatmul.mubr.f32.gmra.mrb[0].mxu0 %v1853
      %v1978 = vpop.f32.mrb[0].mxu0
      %v1979 = vadd.f32 0.0, %v1978
      %v1980 = vpop.f32.mrb[0].mxu0
      %1981 = vmatprep.mubr.f32.mxu0 0.0
      %1982 = vmatmul.mubr.f32.gmra.mrb[0].mxu0 %v1856
      %v1983 = vpop.f32.mrb[0].mxu0
      %v1984 = vadd.f32 0.0, %v1983
      %v1985 = vpop.f32.mrb[0].mxu0
      %1986 = vmatprep.mubr.f32.mxu0 0.0
      %1987 = vmatmul.mubr.f32.gmra.mrb[0].mxu0 %v1859
      %v1988 = vpop.f32.mrb[0].mxu0
      %v1989 = vadd.f32 0.0, %v1988
      %v1990 = vpop.f32.mrb[0].mxu0
      %1991 = vmatprep.mubr.f32.mxu0 0.0
      %1992 = vmatmul.mubr.f32.gmra.mrb[0].mxu0 %v1862
      %v1993 = vpop.f32.mrb[0].mxu0
      %v1994 = vadd.f32 0.0, %v1993
      %v1995 = vpop.f32.mrb[0].mxu0
      %1996 = vmatprep.mubr.f32.mxu0 0.0
      %1997 = vmatmul.mubr.f32.gmra.mrb[0].mxu0 %v1865
      %v1998 = vpop.f32.mrb[0].mxu0
      %v1999 = vadd.f32 0.0, %v1998
      %v2000 = vpop.f32.mrb[0].mxu0
      %2001 = vmatprep.mubr.f32.mxu0 0.0
      %2002 = vmatmul.mubr.f32.gmra.mrb[0].mxu0 %v1868
      %v2003 = vpop.f32.mrb[0].mxu0
      %v2004 = vadd.f32 0.0, %v2003
      %v2005 = vpop.f32.mrb[0].mxu0
      %2006 = vmatprep.mubr.f32.mxu0 0.0
      %2007 = vmatmul.mubr.f32.gmra.mrb[0].mxu0 %v1871
      %v2008 = vpop.f32.mrb[0].mxu0
      %v2009 = vadd.f32 0.0, %v2008
      %v2010 = vpop.f32.mrb[0].mxu0
      %2011 = vmatprep.mubr.f32.mxu0 0.0
      %2012 = vmatmul.mubr.f32.gmra.mrb[0].mxu0 %v1874
      %v2013 = vpop.f32.mrb[0].mxu0
      %v2014 = vadd.f32 0.0, %v2013
      %v2015 = vpop.f32.mrb[0].mxu0
      %2016 = vmatprep.mubr.f32.mxu0 0.0
      %2017 = vmatmul.mubr.f32.gmra.mrb[0].mxu0 %v1877
      %v2018 = vpop.f32.mrb[0].mxu0
      %v2019 = vadd.f32 0.0, %v2018
      %v2020 = vpop.f32.mrb[0].mxu0
      %2021 = vmatprep.mubr.f32.mxu0 0.0
      %2022 = vmatmul.mubr.f32.gmra.mrb[0].mxu0 %v1880
      %v2023 = vpop.f32.mrb[0].mxu0
      %v2024 = vadd.f32 0.0, %v2023
      %v2025 = vpop.f32.mrb[0].mxu0
      %2026 = vdwg.mxu0
      %v2027 = vadd.f32 %v1793, %v1949
      %v2028 = vadd.f32 %v1794, %v1954
      %v2029 = vadd.f32 %v1795, %v1959
      %v2030 = vadd.f32 %v1796, %v1964
      %v2031 = vadd.f32 %v1797, %v1969
      %v2032 = vadd.f32 %v1798, %v1974
      %v2033 = vadd.f32 %v1799, %v1979
      %v2034 = vadd.f32 %v1800, %v1984
      %v2035 = vadd.f32 %v1801, %v1989
      %v2036 = vadd.f32 %v1802, %v1994
      %v2037 = vadd.f32 %v1803, %v1999
      %v2038 = vadd.f32 %v1804, %v2004
      %v2039 = vadd.f32 %v1805, %v2009
      %v2040 = vadd.f32 %v1806, %v2014
      %v2041 = vadd.f32 %v1807, %v2019
      %v2042 = vadd.f32 %v1808, %v2024
      %v2043 = vld [vmem:[%s1574 + $0x2] sm:$0xff]
      %v2044 = vld [vmem:[%s1574 + $0xa] sm:$0xff]
      %v2045 = vld [vmem:[%s1574 + $0x1a] sm:$0xff]
      %v2046 = vld [vmem:[%s1574 + $0x22] sm:$0xff]
      %v2047 = vld [vmem:[%s1574 + $0x32] sm:$0xff]
      %v2048 = vld [vmem:[%s1574 + $0x3a] sm:$0xff]
      %v2049 = vld [vmem:[%s1574 + $0x4a] sm:$0xff]
      %v2050 = vld [vmem:[%s1574 + $0x52] sm:$0xff]
      %v2051 = vld [vmem:[%s1574 + $0x62] sm:$0xff]
      %v2052 = vld [vmem:[%s1574 + $0x6a] sm:$0xff]
      %v2053 = vld [vmem:[%s1574 + $0x7a] sm:$0xff]
      %v2054 = vld [vmem:[%s1574 + $0x82] sm:$0xff]
      %v2055 = vld [vmem:[%s1574 + $0x92] sm:$0xff]
      %v2056 = vld [vmem:[%s1574 + $0x9a] sm:$0xff]
      %v2057 = vld [vmem:[%s1574 + $0xaa] sm:$0xff]
      %v2058 = vld [vmem:[%s1574 + $0xb2] sm:$0xff]
      %s2059 = scalar_lea.vmem %s1, 512
      %v2060 = vld [vmem:[%s2059] sm:$0xff]
      %v2061 = vld [vmem:[%s2059 + $0x8] sm:$0xff]
      %v2062 = vld [vmem:[%s2059 + $0x10] sm:$0xff]
      %v2063 = vld [vmem:[%s2059 + $0x18] sm:$0xff]
      %v2064 = vld [vmem:[%s2059 + $0x20] sm:$0xff]
      %v2065 = vld [vmem:[%s2059 + $0x28] sm:$0xff]
      %v2066 = vld [vmem:[%s2059 + $0x30] sm:$0xff]
      %v2067 = vld [vmem:[%s2059 + $0x38] sm:$0xff]
      %v2069 = vsel %vm246, %v2043, 0
      %v2072 = vsel %vm246, %v2044, 0
      %v2075 = vsel %vm246, %v2045, 0
      %v2078 = vsel %vm246, %v2046, 0
      %v2081 = vsel %vm246, %v2047, 0
      %v2084 = vsel %vm246, %v2048, 0
      %v2087 = vsel %vm246, %v2049, 0
      %v2090 = vsel %vm246, %v2050, 0
      %v2093 = vsel %vm246, %v2051, 0
      %v2096 = vsel %vm246, %v2052, 0
      %v2099 = vsel %vm246, %v2053, 0
      %v2102 = vsel %vm246, %v2054, 0
      %v2105 = vsel %vm246, %v2055, 0
      %v2108 = vsel %vm246, %v2056, 0
      %v2111 = vsel %vm246, %v2057, 0
      %v2114 = vsel %vm246, %v2058, 0
      %2116 = vmatprep.subr.mxu0 0.0
      %2117 = vmatpush1.msra.mxu0 %v2060
      %2118 = vmatprep.subr.mxu0 0.0
      %2119 = vmatpush1.msra.mxu0 %v2061
      %2120 = vmatprep.subr.mxu0 0.0
      %2121 = vmatpush1.msra.mxu0 %v2062
      %2122 = vmatprep.subr.mxu0 0.0
      %2123 = vmatpush1.msra.mxu0 %v2063
      %2124 = vmatprep.subr.mxu0 0.0
      %2125 = vmatpush1.msra.mxu0 %v2064
      %2126 = vmatprep.subr.mxu0 0.0
      %2127 = vmatpush1.msra.mxu0 %v2065
      %2128 = vmatprep.subr.mxu0 0.0
      %2129 = vmatpush1.msra.mxu0 %v2066
      %2130 = vmatprep.subr.mxu0 0.0
      %2131 = vmatpush1.msra.mxu0 %v2067
      %2132 = vmatprep.subr.mxu0 0.0
      %2133 = vmatpush1.msra.mxu0 0.0
      %2134 = vmatprep.subr.mxu0 0.0
      %2135 = vmatpush1.msra.mxu0 0.0
      %2136 = vmatprep.subr.mxu0 0.0
      %2137 = vmatpush1.msra.mxu0 0.0
      %2138 = vmatprep.subr.mxu0 0.0
      %2139 = vmatpush1.msra.mxu0 0.0
      %2140 = vmatprep.subr.mxu0 0.0
      %2141 = vmatpush1.msra.mxu0 0.0
      %2142 = vmatprep.subr.mxu0 0.0
      %2143 = vmatpush1.msra.mxu0 0.0
      %2144 = vmatprep.subr.mxu0 0.0
      %2145 = vmatpush1.msra.mxu0 0.0
      %2146 = vmatprep.subr.mxu0 0.0
      %2147 = vmatpush1.msra.mxu0 0.0
      %2148 = vmatprep.subr.mxu0 0.0
      %2149 = vmatpush1.msra.mxu0 0.0
      %2150 = vmatprep.subr.mxu0 0.0
      %2151 = vmatpush1.msra.mxu0 0.0
      %2152 = vmatprep.subr.mxu0 0.0
      %2153 = vmatpush1.msra.mxu0 0.0
      %2154 = vmatprep.subr.mxu0 0.0
      %2155 = vmatpush1.msra.mxu0 0.0
      %2156 = vmatprep.subr.mxu0 0.0
      %2157 = vmatpush1.msra.mxu0 0.0
      %2158 = vmatprep.subr.mxu0 0.0
      %2159 = vmatpush1.msra.mxu0 0.0
      %2160 = vmatprep.subr.mxu0 0.0
      %2161 = vmatpush1.msra.mxu0 0.0
      %2162 = vmatprep.subr.mxu0 0.0
      %2163 = vmatpush1.msra.mxu0 0.0
      %2164 = vmatprep.subr.mxu0 0.0
      %2165 = vmatpush1.msra.mxu0 0.0
      %2166 = vmatprep.subr.mxu0 0.0
      %2167 = vmatpush1.msra.mxu0 0.0
      %2168 = vmatprep.subr.mxu0 0.0
      %2169 = vmatpush1.msra.mxu0 0.0
      %2170 = vmatprep.subr.mxu0 0.0
      %2171 = vmatpush1.msra.mxu0 0.0
      %2172 = vmatprep.subr.mxu0 0.0
      %2173 = vmatpush1.msra.mxu0 0.0
      %2174 = vmatprep.subr.mxu0 0.0
      %2175 = vmatpush1.msra.mxu0 0.0
      %2176 = vmatprep.subr.mxu0 0.0
      %2177 = vmatpush1.msra.mxu0 0.0
      %2178 = vmatprep.subr.mxu0 0.0
      %2179 = vmatpush1.msra.mxu0 0.0
      %2180 = vmatprep.mubr.f32.mxu0 0.0
      %2181 = vmatmul.mubr.f32.gmra.mrb[0].mxu0 %v2069
      %v2182 = vpop.f32.mrb[0].mxu0
      %v2183 = vadd.f32 0.0, %v2182
      %v2184 = vpop.f32.mrb[0].mxu0
      %2185 = vmatprep.mubr.f32.mxu0 0.0
      %2186 = vmatmul.mubr.f32.gmra.mrb[0].mxu0 %v2072
      %v2187 = vpop.f32.mrb[0].mxu0
      %v2188 = vadd.f32 0.0, %v2187
      %v2189 = vpop.f32.mrb[0].mxu0
      %2190 = vmatprep.mubr.f32.mxu0 0.0
      %2191 = vmatmul.mubr.f32.gmra.mrb[0].mxu0 %v2075
      %v2192 = vpop.f32.mrb[0].mxu0
      %v2193 = vadd.f32 0.0, %v2192
      %v2194 = vpop.f32.mrb[0].mxu0
      %2195 = vmatprep.mubr.f32.mxu0 0.0
      %2196 = vmatmul.mubr.f32.gmra.mrb[0].mxu0 %v2078
      %v2197 = vpop.f32.mrb[0].mxu0
      %v2198 = vadd.f32 0.0, %v2197
      %v2199 = vpop.f32.mrb[0].mxu0
      %2200 = vmatprep.mubr.f32.mxu0 0.0
      %2201 = vmatmul.mubr.f32.gmra.mrb[0].mxu0 %v2081
      %v2202 = vpop.f32.mrb[0].mxu0
      %v2203 = vadd.f32 0.0, %v2202
      %v2204 = vpop.f32.mrb[0].mxu0
      %2205 = vmatprep.mubr.f32.mxu0 0.0
      %2206 = vmatmul.mubr.f32.gmra.mrb[0].mxu0 %v2084
      %v2207 = vpop.f32.mrb[0].mxu0
      %v2208 = vadd.f32 0.0, %v2207
      %v2209 = vpop.f32.mrb[0].mxu0
      %2210 = vmatprep.mubr.f32.mxu0 0.0
      %2211 = vmatmul.mubr.f32.gmra.mrb[0].mxu0 %v2087
      %v2212 = vpop.f32.mrb[0].mxu0
      %v2213 = vadd.f32 0.0, %v2212
      %v2214 = vpop.f32.mrb[0].mxu0
      %2215 = vmatprep.mubr.f32.mxu0 0.0
      %2216 = vmatmul.mubr.f32.gmra.mrb[0].mxu0 %v2090
      %v2217 = vpop.f32.mrb[0].mxu0
      %v2218 = vadd.f32 0.0, %v2217
      %v2219 = vpop.f32.mrb[0].mxu0
      %2220 = vmatprep.mubr.f32.mxu0 0.0
      %2221 = vmatmul.mubr.f32.gmra.mrb[0].mxu0 %v2093
      %v2222 = vpop.f32.mrb[0].mxu0
      %v2223 = vadd.f32 0.0, %v2222
      %v2224 = vpop.f32.mrb[0].mxu0
      %2225 = vmatprep.mubr.f32.mxu0 0.0
      %2226 = vmatmul.mubr.f32.gmra.mrb[0].mxu0 %v2096
      %v2227 = vpop.f32.mrb[0].mxu0
      %v2228 = vadd.f32 0.0, %v2227
      %v2229 = vpop.f32.mrb[0].mxu0
      %2230 = vmatprep.mubr.f32.mxu0 0.0
      %2231 = vmatmul.mubr.f32.gmra.mrb[0].mxu0 %v2099
      %v2232 = vpop.f32.mrb[0].mxu0
      %v2233 = vadd.f32 0.0, %v2232
      %v2234 = vpop.f32.mrb[0].mxu0
      %2235 = vmatprep.mubr.f32.mxu0 0.0
      %2236 = vmatmul.mubr.f32.gmra.mrb[0].mxu0 %v2102
      %v2237 = vpop.f32.mrb[0].mxu0
      %v2238 = vadd.f32 0.0, %v2237
      %v2239 = vpop.f32.mrb[0].mxu0
      %2240 = vmatprep.mubr.f32.mxu0 0.0
      %2241 = vmatmul.mubr.f32.gmra.mrb[0].mxu0 %v2105
      %v2242 = vpop.f32.mrb[0].mxu0
      %v2243 = vadd.f32 0.0, %v2242
      %v2244 = vpop.f32.mrb[0].mxu0
      %2245 = vmatprep.mubr.f32.mxu0 0.0
      %2246 = vmatmul.mubr.f32.gmra.mrb[0].mxu0 %v2108
      %v2247 = vpop.f32.mrb[0].mxu0
      %v2248 = vadd.f32 0.0, %v2247
      %v2249 = vpop.f32.mrb[0].mxu0
      %2250 = vmatprep.mubr.f32.mxu0 0.0
      %2251 = vmatmul.mubr.f32.gmra.mrb[0].mxu0 %v2111
      %v2252 = vpop.f32.mrb[0].mxu0
      %v2253 = vadd.f32 0.0, %v2252
      %v2254 = vpop.f32.mrb[0].mxu0
      %2255 = vmatprep.mubr.f32.mxu0 0.0
      %2256 = vmatmul.mubr.f32.gmra.mrb[0].mxu0 %v2114
      %v2257 = vpop.f32.mrb[0].mxu0
      %v2258 = vadd.f32 0.0, %v2257
      %v2259 = vpop.f32.mrb[0].mxu0
      %2260 = vdwg.mxu0
      %v2261 = vadd.f32 %v2027, %v2183
      %v2262 = vadd.f32 %v2028, %v2188
      %v2263 = vadd.f32 %v2029, %v2193
      %v2264 = vadd.f32 %v2030, %v2198
      %v2265 = vadd.f32 %v2031, %v2203
      %v2266 = vadd.f32 %v2032, %v2208
      %v2267 = vadd.f32 %v2033, %v2213
      %v2268 = vadd.f32 %v2034, %v2218
      %v2269 = vadd.f32 %v2035, %v2223
      %v2270 = vadd.f32 %v2036, %v2228
      %v2271 = vadd.f32 %v2037, %v2233
      %v2272 = vadd.f32 %v2038, %v2238
      %v2273 = vadd.f32 %v2039, %v2243
      %v2274 = vadd.f32 %v2040, %v2248
      %v2275 = vadd.f32 %v2041, %v2253
      %v2276 = vadd.f32 %v2042, %v2258
      %v2277 = vld [vmem:[%s2] sm:$0x1]
      %v2279 = vlaneseq
      %v2280 = vshrl.u32 %v2279, 7
      %v2281 = vsub.s32 0, %v2280
      %v2282 = vrot.slane %v2277, %v2281
      %v2284 = vadd.f32 %v2261, %v2282
      %v2285 = vadd.f32 %v2262, %v2282
      %v2286 = vadd.f32 %v2263, %v2282
      %v2287 = vadd.f32 %v2264, %v2282
      %v2288 = vadd.f32 %v2265, %v2282
      %v2289 = vadd.f32 %v2266, %v2282
      %v2290 = vadd.f32 %v2267, %v2282
      %v2291 = vadd.f32 %v2268, %v2282
      %v2292 = vadd.f32 %v2269, %v2282
      %v2293 = vadd.f32 %v2270, %v2282
      %v2294 = vadd.f32 %v2271, %v2282
      %v2295 = vadd.f32 %v2272, %v2282
      %v2296 = vadd.f32 %v2273, %v2282
      %v2297 = vadd.f32 %v2274, %v2282
      %v2298 = vadd.f32 %v2275, %v2282
      %v2299 = vadd.f32 %v2276, %v2282
      %v2300 = vmax.f32 %v2284, 0.0
      %v2301 = vmax.f32 %v2285, 0.0
      %v2302 = vmax.f32 %v2286, 0.0
      %v2303 = vmax.f32 %v2287, 0.0
      %v2304 = vmax.f32 %v2288, 0.0
      %v2305 = vmax.f32 %v2289, 0.0
      %v2306 = vmax.f32 %v2290, 0.0
      %v2307 = vmax.f32 %v2291, 0.0
      %v2308 = vmax.f32 %v2292, 0.0
      %v2309 = vmax.f32 %v2293, 0.0
      %v2310 = vmax.f32 %v2294, 0.0
      %v2311 = vmax.f32 %v2295, 0.0
      %v2312 = vmax.f32 %v2296, 0.0
      %v2313 = vmax.f32 %v2297, 0.0
      %v2314 = vmax.f32 %v2298, 0.0
      %v2315 = vmax.f32 %v2299, 0.0
      %2316 = vst.msk [vmem:[%s192] sm:$0xff] %vm246, %v2300
      %2317 = vst.msk [vmem:[%s192 + $0x8] sm:$0xff] %vm246, %v2301
      %2318 = vst.msk [vmem:[%s192 + $0x10] sm:$0xff] %vm246, %v2302
      %2319 = vst.msk [vmem:[%s192 + $0x18] sm:$0xff] %vm246, %v2303
      %2320 = vst.msk [vmem:[%s192 + $0x20] sm:$0xff] %vm246, %v2304
      %2321 = vst.msk [vmem:[%s192 + $0x28] sm:$0xff] %vm246, %v2305
      %2322 = vst.msk [vmem:[%s192 + $0x30] sm:$0xff] %vm246, %v2306
      %2323 = vst.msk [vmem:[%s192 + $0x38] sm:$0xff] %vm246, %v2307
      %2324 = vst.msk [vmem:[%s192 + $0x40] sm:$0xff] %vm246, %v2308
      %2325 = vst.msk [vmem:[%s192 + $0x48] sm:$0xff] %vm246, %v2309
      %2326 = vst.msk [vmem:[%s192 + $0x50] sm:$0xff] %vm246, %v2310
      %2327 = vst.msk [vmem:[%s192 + $0x58] sm:$0xff] %vm246, %v2311
      %2328 = vst.msk [vmem:[%s192 + $0x60] sm:$0xff] %vm246, %v2312
      %2329 = vst.msk [vmem:[%s192 + $0x68] sm:$0xff] %vm246, %v2313
      %2330 = vst.msk [vmem:[%s192 + $0x70] sm:$0xff] %vm246, %v2314
      %2331 = vst.msk [vmem:[%s192 + $0x78] sm:$0xff] %vm246, %v2315
      %s2332 = smul.u32 16, %s19
      %p2333 = scmp.lt.s32.totalorder %s18, 1
      %s2334 = scalar_select %p2333, %s18, 1
      %p2335 = scmp.lt.s32.totalorder %s2332, 31
      %s2336 = scalar_select %p2335, %s2332, 31
      %s2337 = smul.addr %s2334, 32
      %s2338 = sadd.s32 %s2336, %s2337
      %s2339 = smul.addr %s2338, 8
      %s2340 = scalar_lea.vmem %s3, %s2339
      // Predicated region
      $region33: #{tpu_custom_call.1} parent=31 // pred_check
        %p2341 = pneg %p114
      $region34: #{tpu_custom_call.1} parent=31 // pred_check_branch
        %2343 = sbr.rel (%p2341) target = $region36
      $region35: #{tpu_custom_call.1} parent=31 // pred_region
        %s2344 = smul.u32 16, %s19
      $region36: #{tpu_custom_call.1} parent=31 // pred_fallthru
        _
    $region32: #{tpu_custom_call.1} parent=5 // pred_fallthru
      _
    %p2345 = scmp.le.s32.totalorder 2, %s9
    // Predicated region
    $region37: #{tpu_custom_call.1} parent=5 // pred_check
      %p2346 = pneg %p2345
    $region38: #{tpu_custom_call.1} parent=5 // pred_check_branch
      %2348 = sbr.rel (%p2346) target = $region40
    $region39: #{tpu_custom_call.1} parent=5 // pred_region
      %s2349 = ssub.s32 %s9, 2
      // Predicated region
      $region41: #{tpu_custom_call.1} parent=39 // pred_check
        %p2350 = pneg %p120
      $region42: #{tpu_custom_call.1} parent=39 // pred_check_branch
        %2352 = sbr.rel (%p2350) target = $region44
      $region43: #{tpu_custom_call.1} parent=39 // pred_region
        %s2353 = smul.u32 16, %s21
        %p2354 = scmp.lt.s32.totalorder %s20, 1
        %s2355 = scalar_select %p2354, %s20, 1
        %p2356 = scmp.lt.s32.totalorder %s2353, 31
        %s2357 = scalar_select %p2356, %s2353, 31
        %s2358 = smul.addr %s2355, 32
        %s2359 = sadd.s32 %s2357, %s2358
        %s2360 = smul.addr %s2359, 8
        %s2361 = scalar_lea.vmem %s3, %s2360
      $region44: #{tpu_custom_call.1} parent=39 // pred_fallthru
        _
    $region40: #{tpu_custom_call.1} parent=5 // pred_fallthru
      _
  $region6: #{tpu_custom_call.1} parent=0 // loop_footer
    %s13 = sadd.s32 1, %s9
  $region7: #{tpu_custom_call.1} parent=0 // loop_footer_branch
    %8 = sbr.rel target = $region3
  $region8: #{tpu_custom_call.1} parent=0 // loop_exit
    _

</llo_original>
